<compile_context>
chip_gen: v6e
topology: v6e:2x2x1
jax: 0.10.0
libtpu: 0.0.40
codegen_flags: <defaults>
</compile_context>

<pallas_src>
import functools

import jax
import jax.numpy as jnp
from jax.experimental import pallas as pl
from jax.experimental.pallas import tpu as pltpu


def _cdiv(a, b):
    return (a + b - 1) // b


def _round_up(x, m):
    return _cdiv(x, m) * m


def _round_down(x, m):
    return (x // m) * m


def _distill_kl_kernel(ys_ref, yt_ref, out_ref, m_s, m_t, z_s, z_t, w_acc,
                       *, B, C, tb, tc):
    """Online per-row KL(p_t || p_s) over class tiles; per-row output (tb, 1)."""
    bi = pl.program_id(0)
    ci = pl.program_id(1)
    nc = pl.num_programs(1)
    mask_rows = (B % tb) != 0          # resolved at trace time
    mask_cols = (C % tc) != 0

    @pl.when(ci == 0)
    def _init():
        m_s[...] = jnp.full_like(m_s, -jnp.inf)
        m_t[...] = jnp.full_like(m_t, -jnp.inf)
        z_s[...] = jnp.zeros_like(z_s)
        z_t[...] = jnp.zeros_like(z_t)
        w_acc[...] = jnp.zeros_like(w_acc)

    ys = ys_ref[...].astype(jnp.float32)
    yt = yt_ref[...].astype(jnp.float32)
    diff = yt - ys
    if mask_cols:
        col = jax.lax.broadcasted_iota(jnp.int32, ys.shape, 1) + ci * tc
        valid = col < C
        ys = jnp.where(valid, ys, -jnp.inf)    # -> exp == 0, excluded from max
        yt = jnp.where(valid, yt, -jnp.inf)
        diff = jnp.where(valid, diff, 0.0)     # avoid inf - inf = NaN

    nm_s = jnp.maximum(m_s[...], jnp.max(ys, axis=-1, keepdims=True))
    nm_t = jnp.maximum(m_t[...], jnp.max(yt, axis=-1, keepdims=True))
    a_s = jnp.exp(m_s[...] - nm_s)             # == 0 on the first class tile
    a_t = jnp.exp(m_t[...] - nm_t)
    e_s = jnp.exp(ys - nm_s)
    e_t = jnp.exp(yt - nm_t)
    z_s[...] = a_s * z_s[...] + jnp.sum(e_s, axis=-1, keepdims=True)
    z_t[...] = a_t * z_t[...] + jnp.sum(e_t, axis=-1, keepdims=True)
    w_acc[...] = a_t * w_acc[...] + jnp.sum(e_t * diff, axis=-1, keepdims=True)
    m_s[...] = nm_s
    m_t[...] = nm_t

    @pl.when(ci == nc - 1)
    def _finalize():
        kl = (w_acc[...] / z_t[...] + (m_s[...] - m_t[...])
              + jnp.log(z_s[...]) - jnp.log(z_t[...]))
        if mask_rows:
            row = jax.lax.broadcasted_iota(jnp.int32, kl.shape, 0) + bi * tb
            kl = jnp.where(row < B, kl, 0.0)   # ragged tail rows contribute 0
        out_ref[...] = kl


_FAST_PATH_BYTES = 256 * 1024      # per operand; below this, plain XLA wins


def _kl_elementwise_jnp(y_s, y_t):
    log_p_s = jax.nn.log_softmax(y_s.astype(jnp.float32), axis=1)
    log_p_t = jax.nn.log_softmax(y_t.astype(jnp.float32), axis=1)
    p_t = jnp.exp(log_p_t)
    return p_t * (log_p_t - log_p_s)


def _vmem_budget_bytes():
    cap = 128 * 1024 * 1024
    try:
        cap = int(getattr(pltpu.get_tpu_info(), "vmem_capacity_bytes", cap))
    except Exception:
        pass
    # ~3/8 of per-core VMEM: 40 MiB (capped) on v5e/v6e (128 MiB), 24 MiB on
    # v7x (64 MiB/TC) so Mosaic keeps scratch / relayout headroom.
    return int(min(40 * 1024 * 1024, max(16 * 1024 * 1024, (cap * 3) // 8)))


def _choose_tiles(B, C, itemsize, budget_bytes):
    sublane = max(8, 32 // max(itemsize, 1))   # 8 rows f32, 16 bf16, 32 int8
    lane = 128
    # 2 inputs x 2 pipeline buffers (input dtype) + ~6 live f32 temps / element.
    per_elem = 2 * 2 * itemsize + 6 * 4
    b_ceil = _round_up(B, sublane)

    if sublane * C * per_elem <= budget_bytes:
        # A full-C block fits: tile the batch axis only (single class step).
        tc = C
        tb_mem = max(sublane, _round_down(budget_bytes // (C * per_elem), sublane))
        # Aim for ~8 grid steps (DMA/compute overlap + v7x megacore sharding)...
        tb_split = _round_up(_cdiv(B, 8), sublane)
        # ...but keep each input tile around >= 512 KiB...
        tb_traffic = _round_up(_cdiv(512 * 1024, max(C * itemsize, 1)), sublane)
        # ...and never fewer than 2 batch tiles when the batch allows it.
        tb_two = max(sublane, _round_up(_cdiv(B, 2), sublane))
        tb = max(tb_split, min(tb_traffic, tb_two))
        tb = min(tb, tb_mem, b_ceil, 2048)
        return max(tb, sublane), tc

    # Vocab-scale C: tile the class axis too (online reduction in the kernel).
    tb = max(sublane, min(b_ceil, _round_up(_cdiv(B, 2), sublane), 128))
    tc = _round_down(budget_bytes // max(tb * per_elem, 1), lane)
    tc = max(lane, min(tc, _round_up(C, lane)))
    return tb, tc


class DistillKL:
    """Distilling the Knowledge in a Neural Network (Pallas TPU forward)."""

    def __init__(self, T):
        # Stored for parity with the PyTorch module; its forward() never uses T.
        self.T = T
        self._tile_override = None   # optional (tb, tc) for tests / tuning

    def __call__(self, y_s, y_t, reduction="batchmean"):
        assert y_s.ndim == 2 and y_s.shape == y_t.shape, "expect [batch, classes] logits"
        B, C = y_s.shape

        if reduction == "none":
            # Elementwise output: no useful Pallas tiling win; plain XLA graph.
            return _kl_elementwise_jnp(y_s, y_t)

        itemsize = jnp.dtype(y_s.dtype).itemsize
        small = B * C * itemsize <= _FAST_PATH_BYTES
        if small and self._tile_override is None:
            total = jnp.sum(_kl_elementwise_jnp(y_s, y_t))
        else:
            total = self._pallas_total_kl(y_s, y_t)

        if reduction == "batchmean":
            return total / B
        if reduction == "sum":
            return total
        if reduction == "mean":
            return total / (B * C)
        raise NotImplementedError(f"reduction={reduction!r} not supported")

    def _pallas_total_kl(self, y_s, y_t):
        B, C = y_s.shape
        itemsize = jnp.dtype(y_s.dtype).itemsize
        if self._tile_override is not None:
            tb, tc = self._tile_override
        else:
            tb, tc = _choose_tiles(B, C, itemsize, _vmem_budget_bytes())
        num_b = _cdiv(B, tb)
        num_c = _cdiv(C, tc)

        need = tb * tc * (2 * 2 * itemsize + 6 * 4) + (2 << 20)
        vmem_limit = int(min(48 * 1024 * 1024, max(need, 16 * 1024 * 1024)))

        kernel = functools.partial(_distill_kl_kernel, B=B, C=C, tb=tb, tc=tc)
        row_kl = pl.pallas_call(
            kernel,
            out_shape=jax.ShapeDtypeStruct((num_b * tb, 1), jnp.float32),
            grid=(num_b, num_c),
            in_specs=[
                pl.BlockSpec((tb, tc), lambda b, c: (b, c)),
                pl.BlockSpec((tb, tc), lambda b, c: (b, c)),
            ],
            out_specs=pl.BlockSpec((tb, 1), lambda b, c: (b, 0)),
            scratch_shapes=[pltpu.VMEM((tb, 1), jnp.float32)] * 5,
            compiler_params=pltpu.CompilerParams(
                dimension_semantics=("parallel", "arbitrary"),
                vmem_limit_bytes=vmem_limit,
            ),
        )(y_s, y_t)
        # TODO(synk): emit per-tile partial sums into a lane-dense slab instead
        # of the (tb, 1) per-row column if the epilogue ever shows up in traces.
        return jnp.sum(row_kl)   # rows past B were written as exactly 0


def _reference(y_s, y_t):
    log_p_s = jax.nn.log_softmax(y_s.astype(jnp.float32), axis=1)
    log_p_t = jax.nn.log_softmax(y_t.astype(jnp.float32), axis=1)
    p_t = jnp.exp(log_p_t)
    return jnp.sum(p_t * (log_p_t - log_p_s)) / y_s.shape[0]


def _check(loss, ref, tag):
    loss = jax.block_until_ready(loss)
    assert jnp.allclose(loss, ref, rtol=2e-4, atol=1e-6), (tag, loss, ref)


if __name__ == "__main__":
    key = jax.random.PRNGKey(0)
    keys = jax.random.split(key, 8)
    criterion = DistillKL(T=4.0)

    # 1) Tiny logits (module-typical shape) -> small-input fast path.
    y_s = jax.random.normal(keys[0], (8, 128), jnp.float32)
    y_t = jax.random.normal(keys[1], (8, 128), jnp.float32)
    _check(criterion(y_s, y_t), _reference(y_s, y_t), "fast_path")

    # 2) Pallas kernel path: aligned shapes, multi-tile batch grid.
    y_s = jax.random.normal(keys[2], (256, 640), jnp.float32)
    y_t = jax.random.normal(keys[3], (256, 640), jnp.float32)
    _check(criterion(y_s, y_t), _reference(y_s, y_t), "kernel_aligned")

    # 3) Pallas kernel path: ragged batch -> in-kernel row masking (no jnp.pad).
    y_s = jax.random.normal(keys[4], (250, 384), jnp.float32)
    y_t = jax.random.normal(keys[5], (250, 384), jnp.float32)
    _check(criterion(y_s, y_t), _reference(y_s, y_t), "kernel_ragged_batch")

    # 4) Forced class-axis tiling: exercises the online softmax reduction plus
    #    row AND column masking on ragged shapes.
    y_s = jax.random.normal(keys[6], (200, 800), jnp.float32)
    y_t = jax.random.normal(keys[7], (200, 800), jnp.float32)
    criterion._tile_override = (64, 256)
    _check(criterion(y_s, y_t), _reference(y_s, y_t), "kernel_c_tiled")
    criterion._tile_override = None

    print("KERNEL_OK")
</pallas_src>

<mosaic_0001>
module attributes {stable_mosaic.version = 11 : i64} {
  func.func @_distill_kl_kernel(%arg0: i32, %arg1: i32, %arg2: memref<128x640xf32, #tpu.memory_space<vmem>>, %arg3: memref<128x640xf32, #tpu.memory_space<vmem>>, %arg4: memref<128x1xf32, #tpu.memory_space<vmem>>, %arg5: memref<128x1xf32, #tpu.memory_space<vmem>>, %arg6: memref<128x1xf32, #tpu.memory_space<vmem>>, %arg7: memref<128x1xf32, #tpu.memory_space<vmem>>, %arg8: memref<128x1xf32, #tpu.memory_space<vmem>>, %arg9: memref<128x1xf32, #tpu.memory_space<vmem>>) attributes {dimension_semantics = [#tpu.dimension_semantics<parallel>, #tpu.dimension_semantics<arbitrary>], iteration_bounds = array<i64: 2, 1>, scalar_prefetch = 0 : i64, scratch_operands = 5 : i64, tpu.core_type = #tpu.core_type<tc>, window_params = [{transform_indices = @transform_0, window_bounds = array<i64: 128, 640>}, {transform_indices = @transform_1, window_bounds = array<i64: 128, 640>}, {transform_indices = @transform_2, window_bounds = array<i64: 128, 1>}]} {
    %c0_i32 = arith.constant 0 : i32
    %0 = arith.cmpi eq, %arg1, %c0_i32 : i32
    %1 = arith.extui %0 : i1 to i32
    %c0_i32_0 = arith.constant 0 : i32
    %2 = arith.cmpi ne, %1, %c0_i32_0 : i32
    scf.if %2 {
      %cst_34 = arith.constant 0xFF800000 : f32
      %50 = vector.broadcast %cst_34 : f32 to vector<128x1xf32>
      %c0_35 = arith.constant 0 : index
      %c0_36 = arith.constant 0 : index
      %51 = vector.load %arg5[%c0_35, %c0_36] : memref<128x1xf32, #tpu.memory_space<vmem>>, vector<128x1xf32>
      tpu.vector_store %arg5[%c0_35, %c0_36], %50 {strides = array<i32>} : memref<128x1xf32, #tpu.memory_space<vmem>>, vector<128x1xf32>,
      %cst_37 = arith.constant 0xFF800000 : f32
      %52 = vector.broadcast %cst_37 : f32 to vector<128x1xf32>
      %c0_38 = arith.constant 0 : index
      %c0_39 = arith.constant 0 : index
      %53 = vector.load %arg6[%c0_38, %c0_39] : memref<128x1xf32, #tpu.memory_space<vmem>>, vector<128x1xf32>
      tpu.vector_store %arg6[%c0_38, %c0_39], %52 {strides = array<i32>} : memref<128x1xf32, #tpu.memory_space<vmem>>, vector<128x1xf32>,
      %cst_40 = arith.constant 0.000000e+00 : f32
      %54 = vector.broadcast %cst_40 : f32 to vector<128x1xf32>
      %c0_41 = arith.constant 0 : index
      %c0_42 = arith.constant 0 : index
      %55 = vector.load %arg7[%c0_41, %c0_42] : memref<128x1xf32, #tpu.memory_space<vmem>>, vector<128x1xf32>
      tpu.vector_store %arg7[%c0_41, %c0_42], %54 {strides = array<i32>} : memref<128x1xf32, #tpu.memory_space<vmem>>, vector<128x1xf32>,
      %cst_43 = arith.constant 0.000000e+00 : f32
      %56 = vector.broadcast %cst_43 : f32 to vector<128x1xf32>
      %c0_44 = arith.constant 0 : index
      %c0_45 = arith.constant 0 : index
      %57 = vector.load %arg8[%c0_44, %c0_45] : memref<128x1xf32, #tpu.memory_space<vmem>>, vector<128x1xf32>
      tpu.vector_store %arg8[%c0_44, %c0_45], %56 {strides = array<i32>} : memref<128x1xf32, #tpu.memory_space<vmem>>, vector<128x1xf32>,
      %cst_46 = arith.constant 0.000000e+00 : f32
      %58 = vector.broadcast %cst_46 : f32 to vector<128x1xf32>
      %c0_47 = arith.constant 0 : index
      %c0_48 = arith.constant 0 : index
      %59 = vector.load %arg9[%c0_47, %c0_48] : memref<128x1xf32, #tpu.memory_space<vmem>>, vector<128x1xf32>
      tpu.vector_store %arg9[%c0_47, %c0_48], %58 {strides = array<i32>} : memref<128x1xf32, #tpu.memory_space<vmem>>, vector<128x1xf32>,
    } else {
    }
    %c0 = arith.constant 0 : index
    %c0_1 = arith.constant 0 : index
    %3 = vector.load %arg2[%c0, %c0_1] : memref<128x640xf32, #tpu.memory_space<vmem>>, vector<128x640xf32>
    %c0_2 = arith.constant 0 : index
    %c0_3 = arith.constant 0 : index
    %4 = vector.load %arg3[%c0_2, %c0_3] : memref<128x640xf32, #tpu.memory_space<vmem>>, vector<128x640xf32>
    %5 = arith.subf %4, %3 : vector<128x640xf32>
    %c0_4 = arith.constant 0 : index
    %c0_5 = arith.constant 0 : index
    %6 = vector.load %arg5[%c0_4, %c0_5] : memref<128x1xf32, #tpu.memory_space<vmem>>, vector<128x1xf32>
    %cst = arith.constant dense<0xFF800000> : vector<128xf32>
    %7 = vector.multi_reduction <maximumf>, %3, %cst [1] : vector<128x640xf32> to vector<128xf32>
    %8 = vector.shape_cast %7 : vector<128xf32> to vector<128x1xf32>
    %9 = arith.maximumf %6, %8 : vector<128x1xf32>
    %c0_6 = arith.constant 0 : index
    %c0_7 = arith.constant 0 : index
    %10 = vector.load %arg6[%c0_6, %c0_7] : memref<128x1xf32, #tpu.memory_space<vmem>>, vector<128x1xf32>
    %cst_8 = arith.constant dense<0xFF800000> : vector<128xf32>
    %11 = vector.multi_reduction <maximumf>, %4, %cst_8 [1] : vector<128x640xf32> to vector<128xf32>
    %12 = vector.shape_cast %11 : vector<128xf32> to vector<128x1xf32>
    %13 = arith.maximumf %10, %12 : vector<128x1xf32>
    %c0_9 = arith.constant 0 : index
    %c0_10 = arith.constant 0 : index
    %14 = vector.load %arg5[%c0_9, %c0_10] : memref<128x1xf32, #tpu.memory_space<vmem>>, vector<128x1xf32>
    %15 = arith.subf %14, %9 : vector<128x1xf32>
    %16 = math.exp %15 : vector<128x1xf32>
    %c0_11 = arith.constant 0 : index
    %c0_12 = arith.constant 0 : index
    %17 = vector.load %arg6[%c0_11, %c0_12] : memref<128x1xf32, #tpu.memory_space<vmem>>, vector<128x1xf32>
    %18 = arith.subf %17, %13 : vector<128x1xf32>
    %19 = math.exp %18 : vector<128x1xf32>
    %20 = vector.broadcast %9 : vector<128x1xf32> to vector<128x640xf32>
    %21 = arith.subf %3, %20 : vector<128x640xf32>
    %22 = math.exp %21 : vector<128x640xf32>
    %23 = vector.broadcast %13 : vector<128x1xf32> to vector<128x640xf32>
    %24 = arith.subf %4, %23 : vector<128x640xf32>
    %25 = math.exp %24 : vector<128x640xf32>
    %c0_13 = arith.constant 0 : index
    %c0_14 = arith.constant 0 : index
    %26 = vector.load %arg7[%c0_13, %c0_14] : memref<128x1xf32, #tpu.memory_space<vmem>>, vector<128x1xf32>
    %27 = arith.mulf %16, %26 : vector<128x1xf32>
    %cst_15 = arith.constant dense<0.000000e+00> : vector<128xf32>
    %28 = vector.multi_reduction <add>, %22, %cst_15 [1] : vector<128x640xf32> to vector<128xf32>
    %29 = vector.shape_cast %28 : vector<128xf32> to vector<128x1xf32>
    %30 = arith.addf %27, %29 : vector<128x1xf32>
    %c0_16 = arith.constant 0 : index
    %c0_17 = arith.constant 0 : index
    %31 = vector.load %arg7[%c0_16, %c0_17] : memref<128x1xf32, #tpu.memory_space<vmem>>, vector<128x1xf32>
    tpu.vector_store %arg7[%c0_16, %c0_17], %30 {strides = array<i32>} : memref<128x1xf32, #tpu.memory_space<vmem>>, vector<128x1xf32>,
    %c0_18 = arith.constant 0 : index
    %c0_19 = arith.constant 0 : index
    %32 = vector.load %arg8[%c0_18, %c0_19] : memref<128x1xf32, #tpu.memory_space<vmem>>, vector<128x1xf32>
    %33 = arith.mulf %19, %32 : vector<128x1xf32>
    %cst_20 = arith.constant dense<0.000000e+00> : vector<128xf32>
    %34 = vector.multi_reduction <add>, %25, %cst_20 [1] : vector<128x640xf32> to vector<128xf32>
    %35 = vector.shape_cast %34 : vector<128xf32> to vector<128x1xf32>
    %36 = arith.addf %33, %35 : vector<128x1xf32>
    %c0_21 = arith.constant 0 : index
    %c0_22 = arith.constant 0 : index
    %37 = vector.load %arg8[%c0_21, %c0_22] : memref<128x1xf32, #tpu.memory_space<vmem>>, vector<128x1xf32>
    tpu.vector_store %arg8[%c0_21, %c0_22], %36 {strides = array<i32>} : memref<128x1xf32, #tpu.memory_space<vmem>>, vector<128x1xf32>,
    %c0_23 = arith.constant 0 : index
    %c0_24 = arith.constant 0 : index
    %38 = vector.load %arg9[%c0_23, %c0_24] : memref<128x1xf32, #tpu.memory_space<vmem>>, vector<128x1xf32>
    %39 = arith.mulf %19, %38 : vector<128x1xf32>
    %40 = arith.mulf %25, %5 : vector<128x640xf32>
    %cst_25 = arith.constant dense<0.000000e+00> : vector<128xf32>
    %41 = vector.multi_reduction <add>, %40, %cst_25 [1] : vector<128x640xf32> to vector<128xf32>
    %42 = vector.shape_cast %41 : vector<128xf32> to vector<128x1xf32>
    %43 = arith.addf %39, %42 : vector<128x1xf32>
    %c0_26 = arith.constant 0 : index
    %c0_27 = arith.constant 0 : index
    %44 = vector.load %arg9[%c0_26, %c0_27] : memref<128x1xf32, #tpu.memory_space<vmem>>, vector<128x1xf32>
    tpu.vector_store %arg9[%c0_26, %c0_27], %43 {strides = array<i32>} : memref<128x1xf32, #tpu.memory_space<vmem>>, vector<128x1xf32>,
    %c0_28 = arith.constant 0 : index
    %c0_29 = arith.constant 0 : index
    %45 = vector.load %arg5[%c0_28, %c0_29] : memref<128x1xf32, #tpu.memory_space<vmem>>, vector<128x1xf32>
    tpu.vector_store %arg5[%c0_28, %c0_29], %9 {strides = array<i32>} : memref<128x1xf32, #tpu.memory_space<vmem>>, vector<128x1xf32>,
    %c0_30 = arith.constant 0 : index
    %c0_31 = arith.constant 0 : index
    %46 = vector.load %arg6[%c0_30, %c0_31] : memref<128x1xf32, #tpu.memory_space<vmem>>, vector<128x1xf32>
    tpu.vector_store %arg6[%c0_30, %c0_31], %13 {strides = array<i32>} : memref<128x1xf32, #tpu.memory_space<vmem>>, vector<128x1xf32>,
    %c0_i32_32 = arith.constant 0 : i32
    %47 = arith.cmpi eq, %arg1, %c0_i32_32 : i32
    %48 = arith.extui %47 : i1 to i32
    %c0_i32_33 = arith.constant 0 : i32
    %49 = arith.cmpi ne, %48, %c0_i32_33 : i32
    scf.if %49 {
      %c0_34 = arith.constant 0 : index
      %c0_35 = arith.constant 0 : index
      %50 = vector.load %arg9[%c0_34, %c0_35] : memref<128x1xf32, #tpu.memory_space<vmem>>, vector<128x1xf32>
      %c0_36 = arith.constant 0 : index
      %c0_37 = arith.constant 0 : index
      %51 = vector.load %arg8[%c0_36, %c0_37] : memref<128x1xf32, #tpu.memory_space<vmem>>, vector<128x1xf32>
      %52 = arith.divf %50, %51 : vector<128x1xf32>
      %c0_38 = arith.constant 0 : index
      %c0_39 = arith.constant 0 : index
      %53 = vector.load %arg5[%c0_38, %c0_39] : memref<128x1xf32, #tpu.memory_space<vmem>>, vector<128x1xf32>
      %c0_40 = arith.constant 0 : index
      %c0_41 = arith.constant 0 : index
      %54 = vector.load %arg6[%c0_40, %c0_41] : memref<128x1xf32, #tpu.memory_space<vmem>>, vector<128x1xf32>
      %55 = arith.subf %53, %54 : vector<128x1xf32>
      %56 = arith.addf %52, %55 : vector<128x1xf32>
      %c0_42 = arith.constant 0 : index
      %c0_43 = arith.constant 0 : index
      %57 = vector.load %arg7[%c0_42, %c0_43] : memref<128x1xf32, #tpu.memory_space<vmem>>, vector<128x1xf32>
      %58 = math.log %57 : vector<128x1xf32>
      %59 = arith.addf %56, %58 : vector<128x1xf32>
      %c0_44 = arith.constant 0 : index
      %c0_45 = arith.constant 0 : index
      %60 = vector.load %arg8[%c0_44, %c0_45] : memref<128x1xf32, #tpu.memory_space<vmem>>, vector<128x1xf32>
      %61 = math.log %60 : vector<128x1xf32>
      %62 = arith.subf %59, %61 : vector<128x1xf32>
      %c0_46 = arith.constant 0 : index
      %c0_47 = arith.constant 0 : index
      %63 = vector.load %arg4[%c0_46, %c0_47] : memref<128x1xf32, #tpu.memory_space<vmem>>, vector<128x1xf32>
      tpu.vector_store %arg4[%c0_46, %c0_47], %62 {strides = array<i32>} : memref<128x1xf32, #tpu.memory_space<vmem>>, vector<128x1xf32>,
    } else {
    }
    return
  }
  func.func @transform_0(%arg0: i32, %arg1: i32) -> (i32, i32) {
    %c0_i32 = arith.constant 0 : i32
    return %arg0, %arg1 : i32, i32
  }
  func.func @transform_1(%arg0: i32, %arg1: i32) -> (i32, i32) {
    %c0_i32 = arith.constant 0 : i32
    return %arg0, %arg1 : i32, i32
  }
  func.func @transform_2(%arg0: i32, %arg1: i32) -> (i32, i32) {
    %c0_i32 = arith.constant 0 : i32
    %c0_i32_0 = arith.constant 0 : i32
    return %arg0, %c0_i32 : i32, i32
  }
}

</mosaic_0001>

<llo_original>
// kernel: tpu_custom_call.1
$region0: #{tpu_custom_call.1}
  #allocation0 [shape = 'u32[]', space=smem, size = 0x4, offset = 0x4, fixed_abs, tag = 'smem constant byte address 0x4 - core index']
  #allocation1 [shape = 'u32[144,128]{1,0:T(1,128)}', space=vmem, size = 0x12000, scoped, tag = 'internal scratch']
  #allocation2 [shape = 'f32[128,1]{1,0:T(8,128)}', space=vmem, size = 0x10000, scoped, tag = 'scratch operand']
  #allocation3 [shape = 'f32[128,1]{1,0:T(8,128)}', space=vmem, size = 0x10000, scoped, tag = 'scratch operand']
  #allocation4 [shape = 'f32[128,1]{1,0:T(8,128)}', space=vmem, size = 0x10000, scoped, tag = 'scratch operand']
  #allocation5 [shape = 'f32[128,1]{1,0:T(8,128)}', space=vmem, size = 0x10000, scoped, tag = 'scratch operand']
  #allocation6 [shape = 'f32[128,1]{1,0:T(8,128)}', space=vmem, size = 0x10000, scoped, tag = 'scratch operand']
  %s0 = inlined_call_operand.hbm [shape: f32[256,640], index: 0, kind: input, shape index: {}]
  %s1 = inlined_call_operand.hbm [shape: f32[256,640], index: 1, kind: input, shape index: {}]
  %s2 = inlined_call_operand.vmem [shape: f32[256,1], index: 2, kind: output, shape index: {}]
  %s3 = sld [smem:[#allocation0]]
  $region57: #{tpu_custom_call.1} parent=0
    _
  %s5 = ssub.s32 1, %s3
  %s6 = scalar_select 0, %s5, %s3
  $region1: #{tpu_custom_call.1} parent=0
    #allocation7 [shape = 'u8[655360]{0}', space=vmem, size = 0xa0000, scoped, tag = 'input window, operand 0']
    #allocation8 [shape = 's32[2]{0}', space=sflag, size = 0x8, scoped, tag = 'scoped memory for tpu_custom_call.1']
    #allocation9 [shape = 'u8[655360]{0}', space=vmem, size = 0xa0000, scoped, tag = 'input window, operand 1']
    #allocation10 [shape = 's32[2]{0}', space=sflag, size = 0x8, scoped, tag = 'scoped memory for tpu_custom_call.1']
    %7 = vsyncpa [#allocation8], 0
    %s8 = scalar_lea.sflag [#allocation8], 1
    %9 = vsyncpa %s8, 0
    %10 = vsyncpa [#allocation10], 0
    %s11 = scalar_lea.sflag [#allocation10], 1
    %12 = vsyncpa %s11, 0
    loop: start=0, step=1, limit=4
    $region2: #{tpu_custom_call.1} parent=1 // loop_pre_header
      _
    $region3: #{tpu_custom_call.1} parent=1 // loop_header
      %s14 = sphi 0, %s18
      %p15 = scmp.ge.s32.totalorder %s14, 4
      %s21 = sphi 0, %s33
      %s22 = sphi 0, %s29
      %s23 = sphi 0, %s21
      %s24 = sphi 0, %s22
      %s25 = sphi 0, %s23
      %s26 = sphi 0, %s24
      %s38 = sphi 0, %s40
      %s41 = sphi 0, %s38
      %s42 = sphi 0, %s41
      %s58 = sphi 0, %s42
      %s66 = sphi 0, %s68
      %s69 = sphi 0, %s66
      %s70 = sphi 0, %s69
      %s86 = sphi 0, %s70
      %s92 = sphi 0, %s94
      %s95 = sphi 0, %s92
      %s96 = sphi 0, %s95
      %s112 = sphi 0, %s96
    $region4: #{tpu_custom_call.1} parent=1 // loop_header_branch
      %17 = sbr.rel (%p15) target = $region8
    $region5: #{tpu_custom_call.1} parent=1 // loop_body
      %s19 = ssub.s32 %s14, 1
      %s20 = ssub.s32 %s14, 2
      %s27 = sadd.s32 1, %s22
      %p28 = scmp.ge.s32.totalorder %s27, 1
      %s29 = scalar_select %p28, 0, %s27
      %s30 = sadd.s32 1, %s21
      %s31 = scalar_select %p28, %s30, %s21
      %p32 = scmp.ge.s32.totalorder %s31, 2
      %s33 = scalar_select %p32, 0, %s31
      %s34 = ssub.s32 %s21, %s33
      %s35 = ssub.s32 %s22, %s29
      %s36 = sor.u32 %s34, %s35
      %p37 = scmp.eq.s32.totalorder %s36, 0
      %s39 = sadd.s32 %s38, 1
      %s40 = scalar_select %p37, %s38, %s39
      %p43 = pneg %p37
      %p44 = scmp.eq.s32.totalorder %s14, 1
      %p45 = por %p43, %p44
      %p46 = scmp.ne.s32.totalorder %s38, %s41
      %p47 = scmp.eq.s32.totalorder %s14, 0
      %p48 = por %p46, %p47
      %p49 = scmp.ne.s32.totalorder %s38, %s41
      %p50 = scmp.eq.s32.totalorder %s19, 1
      %p51 = por %p49, %p50
      %p52 = scmp.ne.s32.totalorder %s41, %s42
      %p53 = scmp.eq.s32.totalorder %s19, 0
      %p54 = por %p52, %p53
      %p55 = scmp.ne.s32.totalorder %s41, %s42
      %p56 = scmp.eq.s32.totalorder %s20, 1
      %p57 = por %p55, %p56
      %p59 = scmp.ne.s32.totalorder %s42, %s58
      %p60 = scmp.eq.s32.totalorder %s20, 0
      %p61 = por %p59, %p60
      %s62 = ssub.s32 %s21, %s33
      %s63 = ssub.s32 %s22, %s29
      %s64 = sor.u32 %s62, %s63
      %p65 = scmp.eq.s32.totalorder %s64, 0
      %s67 = sadd.s32 %s66, 1
      %s68 = scalar_select %p65, %s66, %s67
      %p71 = pneg %p65
      %p72 = scmp.eq.s32.totalorder %s14, 1
      %p73 = por %p71, %p72
      %p74 = scmp.ne.s32.totalorder %s66, %s69
      %p75 = scmp.eq.s32.totalorder %s14, 0
      %p76 = por %p74, %p75
      %p77 = scmp.ne.s32.totalorder %s66, %s69
      %p78 = scmp.eq.s32.totalorder %s19, 1
      %p79 = por %p77, %p78
      %p80 = scmp.ne.s32.totalorder %s69, %s70
      %p81 = scmp.eq.s32.totalorder %s19, 0
      %p82 = por %p80, %p81
      %p83 = scmp.ne.s32.totalorder %s69, %s70
      %p84 = scmp.eq.s32.totalorder %s20, 1
      %p85 = por %p83, %p84
      %p87 = scmp.ne.s32.totalorder %s70, %s86
      %p88 = scmp.eq.s32.totalorder %s20, 0
      %p89 = por %p87, %p88
      %s90 = ssub.s32 %s21, %s33
      %p91 = scmp.eq.s32.totalorder %s90, 0
      %s93 = sadd.s32 %s92, 1
      %s94 = scalar_select %p91, %s92, %s93
      %p97 = pneg %p91
      %p98 = scmp.eq.s32.totalorder %s14, 1
      %p99 = por %p97, %p98
      %p100 = scmp.ne.s32.totalorder %s92, %s95
      %p101 = scmp.eq.s32.totalorder %s14, 0
      %p102 = por %p100, %p101
      %p103 = scmp.ne.s32.totalorder %s92, %s95
      %p104 = scmp.eq.s32.totalorder %s19, 1
      %p105 = por %p103, %p104
      %p106 = scmp.ne.s32.totalorder %s95, %s96
      %p107 = scmp.eq.s32.totalorder %s19, 0
      %p108 = por %p106, %p107
      %p109 = scmp.ne.s32.totalorder %s95, %s96
      %p110 = scmp.eq.s32.totalorder %s20, 1
      %p111 = por %p109, %p110
      %p113 = scmp.ne.s32.totalorder %s96, %s112
      %p114 = scmp.eq.s32.totalorder %s20, 0
      %p115 = por %p113, %p114
      %p116 = scmp.le.s32.totalorder 1, %s14
      %p117 = scmp.lt.s32.totalorder %s14, 3
      %p118 = pnand %p116, %p117
      %p119 = pneg %p118
      // Predicated region
      $region9: #{tpu_custom_call.1} parent=5 // pred_check
        _
      $region10: #{tpu_custom_call.1} parent=5 // pred_check_branch
        %121 = sbr.rel (%p118) target = $region12
      $region11: #{tpu_custom_call.1} parent=5 // pred_region
        %s122 = ssub.s32 %s14, 1
      $region12: #{tpu_custom_call.1} parent=5 // pred_fallthru
        _
      %p123 = scmp.lt.s32.totalorder %s14, 2
      // Predicated region
      $region13: #{tpu_custom_call.1} parent=5 // pred_check
        %p124 = pneg %p123
      $region14: #{tpu_custom_call.1} parent=5 // pred_check_branch
        %126 = sbr.rel (%p124) target = $region16
      $region15: #{tpu_custom_call.1} parent=5 // pred_region
        // Predicated region
        $region17: #{tpu_custom_call.1} parent=15 // pred_check
          %p127 = pneg %p48
        $region18: #{tpu_custom_call.1} parent=15 // pred_check_branch
          %129 = sbr.rel (%p127) target = $region20
        $region19: #{tpu_custom_call.1} parent=15 // pred_region
          %s130 = sand.u32 %s38, 1
          %s131 = scalar_lea.sflag [#allocation8], %s130
          %s132 = sand.u32 %s38, 1
          %s133 = smul.addr %s132, 640
          %s134 = scalar_lea.vmem [#allocation7], %s133
          %s135 = smul.u32 16, %s21
          %s136 = smul.u32 5, %s22
          %s138 = ssub.s32 10240, 10240
          %139 = vsyncadd %s131, %s138
          %s140 = smul.addr %s135, 5
          %s141 = sadd.s32 %s136, %s140
          %s142 = smul.addr %s141, 128
          %s143 = scalar_lea.hbm %s0, %s142
          %s144 = sshll.u32 %s134, 4
          %s145 = int_to_ptr.vmem [resolvable:$true] %s144
          %150 = dma.hbm_to_vmem [thread:$0]  %s143, 10240, %s145, %s131, 640, 640, 40
        $region20: #{tpu_custom_call.1} parent=15 // pred_fallthru
          _
        // Predicated region
        $region21: #{tpu_custom_call.1} parent=15 // pred_check
          %p151 = pneg %p76
        $region22: #{tpu_custom_call.1} parent=15 // pred_check_branch
          %153 = sbr.rel (%p151) target = $region24
        $region23: #{tpu_custom_call.1} parent=15 // pred_region
          %s154 = sand.u32 %s66, 1
          %s155 = scalar_lea.sflag [#allocation10], %s154
          %s156 = sand.u32 %s66, 1
          %s157 = smul.addr %s156, 640
          %s158 = scalar_lea.vmem [#allocation9], %s157
          %s159 = smul.u32 16, %s21
          %s160 = smul.u32 5, %s22
          %s162 = ssub.s32 10240, 10240
          %163 = vsyncadd %s155, %s162
          %s164 = smul.addr %s159, 5
          %s165 = sadd.s32 %s160, %s164
          %s166 = smul.addr %s165, 128
          %s167 = scalar_lea.hbm %s1, %s166
          %s168 = sshll.u32 %s158, 4
          %s169 = int_to_ptr.vmem [resolvable:$true] %s168
          %174 = dma.hbm_to_vmem [thread:$0]  %s167, 10240, %s169, %s155, 640, 640, 40
        $region24: #{tpu_custom_call.1} parent=15 // pred_fallthru
          _
      $region16: #{tpu_custom_call.1} parent=5 // pred_fallthru
        _
      %p175 = scmp.le.s32.totalorder 1, %s14
      %p176 = scmp.lt.s32.totalorder %s14, 3
      %p177 = pnand %p175, %p176
      %p178 = pneg %p177
      // Predicated region
      $region25: #{tpu_custom_call.1} parent=5 // pred_check
        _
      $region26: #{tpu_custom_call.1} parent=5 // pred_check_branch
        %180 = sbr.rel (%p177) target = $region28
      $region27: #{tpu_custom_call.1} parent=5 // pred_region
        %s181 = ssub.s32 %s14, 1
        %s182 = sand.u32 %s41, 1
        %s183 = scalar_lea.sflag [#allocation8], %s182
        %s184 = sand.u32 %s41, 1
        %s185 = smul.addr %s184, 640
        %s186 = scalar_lea.vmem [#allocation7], %s185
        // Predicated region
        $region29: #{tpu_custom_call.1} parent=27 // pred_check
          %p187 = pneg %p54
        $region30: #{tpu_custom_call.1} parent=27 // pred_check_branch
          %189 = sbr.rel (%p187) target = $region32
        $region31: #{tpu_custom_call.1} parent=27 // pred_region
          %190 = dma.done %s183, 10240
        $region32: #{tpu_custom_call.1} parent=27 // pred_fallthru
          _
        %s191 = sand.u32 %s69, 1
        %s192 = scalar_lea.sflag [#allocation10], %s191
        %s193 = sand.u32 %s69, 1
        %s194 = smul.addr %s193, 640
        %s195 = scalar_lea.vmem [#allocation9], %s194
        // Predicated region
        $region33: #{tpu_custom_call.1} parent=27 // pred_check
          %p196 = pneg %p82
        $region34: #{tpu_custom_call.1} parent=27 // pred_check_branch
          %198 = sbr.rel (%p196) target = $region36
        $region35: #{tpu_custom_call.1} parent=27 // pred_region
          %199 = dma.done %s192, 10240
        $region36: #{tpu_custom_call.1} parent=27 // pred_fallthru
          _
        %s200 = sand.u32 %s41, 1
        %s201 = scalar_lea.sflag [#allocation8], %s200
        %s202 = sand.u32 %s41, 1
        %s203 = smul.addr %s202, 640
        %s204 = scalar_lea.vmem [#allocation7], %s203
        %p205 = pneg %p54
        %p206 = pneg %p51
        %s207 = sand.u32 %s69, 1
        %s208 = scalar_lea.sflag [#allocation10], %s207
        %s209 = sand.u32 %s69, 1
        %s210 = smul.addr %s209, 640
        %s211 = scalar_lea.vmem [#allocation9], %s210
        %p212 = pneg %p82
        %p213 = pneg %p79
        %p214 = pneg %p108
        %p215 = pneg %p105
        %s216 = smul.u32 16, %s23
        %p217 = scmp.lt.s32.totalorder %s216, 31
        %s218 = scalar_select %p217, %s216, 31
        %s219 = smul.addr %s218, 8
        %s220 = scalar_lea.vmem %s2, %s219
        %s221 = smul.u32 16, %s23
        %s222 = smul.u32 5, %s24
        %s223 = smul.u32 16, %s23
        %s224 = smul.u32 5, %s24
        %s225 = smul.u32 16, %s23
        %p226 = scmp.lt.s32.totalorder %s225, 31
        %s227 = scalar_select %p226, %s225, 31
        %s228 = smul.addr %s227, 8
        %s229 = scalar_lea.vmem %s2, %s228
        %s230 = smul.u32 16, %s23
        %p231 = scmp.eq.s32.totalorder %s24, 0
        // Predicated region
        $region37: #{tpu_custom_call.1} parent=27 // pred_check
          %p232 = pneg %p231
        $region38: #{tpu_custom_call.1} parent=27 // pred_check_branch
          %234 = sbr.rel (%p232) target = $region40
        $region39: #{tpu_custom_call.1} parent=27 // pred_region
          %vm235 = vcmask 7168
          %236 = vst.msk [vmem:[#allocation2] sm:$0xff] %vm235, -inf
          %237 = vst.msk [vmem:[#allocation2 + $0x8] sm:$0xff] %vm235, -inf
          %238 = vst.msk [vmem:[#allocation2 + $0x10] sm:$0xff] %vm235, -inf
          %239 = vst.msk [vmem:[#allocation2 + $0x18] sm:$0xff] %vm235, -inf
          %240 = vst.msk [vmem:[#allocation2 + $0x20] sm:$0xff] %vm235, -inf
          %241 = vst.msk [vmem:[#allocation2 + $0x28] sm:$0xff] %vm235, -inf
          %242 = vst.msk [vmem:[#allocation2 + $0x30] sm:$0xff] %vm235, -inf
          %243 = vst.msk [vmem:[#allocation2 + $0x38] sm:$0xff] %vm235, -inf
          %244 = vst.msk [vmem:[#allocation2 + $0x40] sm:$0xff] %vm235, -inf
          %245 = vst.msk [vmem:[#allocation2 + $0x48] sm:$0xff] %vm235, -inf
          %246 = vst.msk [vmem:[#allocation2 + $0x50] sm:$0xff] %vm235, -inf
          %247 = vst.msk [vmem:[#allocation2 + $0x58] sm:$0xff] %vm235, -inf
          %248 = vst.msk [vmem:[#allocation2 + $0x60] sm:$0xff] %vm235, -inf
          %249 = vst.msk [vmem:[#allocation2 + $0x68] sm:$0xff] %vm235, -inf
          %250 = vst.msk [vmem:[#allocation2 + $0x70] sm:$0xff] %vm235, -inf
          %251 = vst.msk [vmem:[#allocation2 + $0x78] sm:$0xff] %vm235, -inf
          %252 = vst.msk [vmem:[#allocation3] sm:$0xff] %vm235, -inf
          %253 = vst.msk [vmem:[#allocation3 + $0x8] sm:$0xff] %vm235, -inf
          %254 = vst.msk [vmem:[#allocation3 + $0x10] sm:$0xff] %vm235, -inf
          %255 = vst.msk [vmem:[#allocation3 + $0x18] sm:$0xff] %vm235, -inf
          %256 = vst.msk [vmem:[#allocation3 + $0x20] sm:$0xff] %vm235, -inf
          %257 = vst.msk [vmem:[#allocation3 + $0x28] sm:$0xff] %vm235, -inf
          %258 = vst.msk [vmem:[#allocation3 + $0x30] sm:$0xff] %vm235, -inf
          %259 = vst.msk [vmem:[#allocation3 + $0x38] sm:$0xff] %vm235, -inf
          %260 = vst.msk [vmem:[#allocation3 + $0x40] sm:$0xff] %vm235, -inf
          %261 = vst.msk [vmem:[#allocation3 + $0x48] sm:$0xff] %vm235, -inf
          %262 = vst.msk [vmem:[#allocation3 + $0x50] sm:$0xff] %vm235, -inf
          %263 = vst.msk [vmem:[#allocation3 + $0x58] sm:$0xff] %vm235, -inf
          %264 = vst.msk [vmem:[#allocation3 + $0x60] sm:$0xff] %vm235, -inf
          %265 = vst.msk [vmem:[#allocation3 + $0x68] sm:$0xff] %vm235, -inf
          %266 = vst.msk [vmem:[#allocation3 + $0x70] sm:$0xff] %vm235, -inf
          %267 = vst.msk [vmem:[#allocation3 + $0x78] sm:$0xff] %vm235, -inf
          %268 = vst.msk [vmem:[#allocation4] sm:$0xff] %vm235, 0.0
          %269 = vst.msk [vmem:[#allocation4 + $0x8] sm:$0xff] %vm235, 0.0
          %270 = vst.msk [vmem:[#allocation4 + $0x10] sm:$0xff] %vm235, 0.0
          %271 = vst.msk [vmem:[#allocation4 + $0x18] sm:$0xff] %vm235, 0.0
          %272 = vst.msk [vmem:[#allocation4 + $0x20] sm:$0xff] %vm235, 0.0
          %273 = vst.msk [vmem:[#allocation4 + $0x28] sm:$0xff] %vm235, 0.0
          %274 = vst.msk [vmem:[#allocation4 + $0x30] sm:$0xff] %vm235, 0.0
          %275 = vst.msk [vmem:[#allocation4 + $0x38] sm:$0xff] %vm235, 0.0
          %276 = vst.msk [vmem:[#allocation4 + $0x40] sm:$0xff] %vm235, 0.0
          %277 = vst.msk [vmem:[#allocation4 + $0x48] sm:$0xff] %vm235, 0.0
          %278 = vst.msk [vmem:[#allocation4 + $0x50] sm:$0xff] %vm235, 0.0
          %279 = vst.msk [vmem:[#allocation4 + $0x58] sm:$0xff] %vm235, 0.0
          %280 = vst.msk [vmem:[#allocation4 + $0x60] sm:$0xff] %vm235, 0.0
          %281 = vst.msk [vmem:[#allocation4 + $0x68] sm:$0xff] %vm235, 0.0
          %282 = vst.msk [vmem:[#allocation4 + $0x70] sm:$0xff] %vm235, 0.0
          %283 = vst.msk [vmem:[#allocation4 + $0x78] sm:$0xff] %vm235, 0.0
          %284 = vst.msk [vmem:[#allocation5] sm:$0xff] %vm235, 0.0
          %285 = vst.msk [vmem:[#allocation5 + $0x8] sm:$0xff] %vm235, 0.0
          %286 = vst.msk [vmem:[#allocation5 + $0x10] sm:$0xff] %vm235, 0.0
          %287 = vst.msk [vmem:[#allocation5 + $0x18] sm:$0xff] %vm235, 0.0
          %288 = vst.msk [vmem:[#allocation5 + $0x20] sm:$0xff] %vm235, 0.0
          %289 = vst.msk [vmem:[#allocation5 + $0x28] sm:$0xff] %vm235, 0.0
          %290 = vst.msk [vmem:[#allocation5 + $0x30] sm:$0xff] %vm235, 0.0
          %291 = vst.msk [vmem:[#allocation5 + $0x38] sm:$0xff] %vm235, 0.0
          %292 = vst.msk [vmem:[#allocation5 + $0x40] sm:$0xff] %vm235, 0.0
          %293 = vst.msk [vmem:[#allocation5 + $0x48] sm:$0xff] %vm235, 0.0
          %294 = vst.msk [vmem:[#allocation5 + $0x50] sm:$0xff] %vm235, 0.0
          %295 = vst.msk [vmem:[#allocation5 + $0x58] sm:$0xff] %vm235, 0.0
          %296 = vst.msk [vmem:[#allocation5 + $0x60] sm:$0xff] %vm235, 0.0
          %297 = vst.msk [vmem:[#allocation5 + $0x68] sm:$0xff] %vm235, 0.0
          %298 = vst.msk [vmem:[#allocation5 + $0x70] sm:$0xff] %vm235, 0.0
          %299 = vst.msk [vmem:[#allocation5 + $0x78] sm:$0xff] %vm235, 0.0
          %300 = vst.msk [vmem:[#allocation6] sm:$0xff] %vm235, 0.0
          %301 = vst.msk [vmem:[#allocation6 + $0x8] sm:$0xff] %vm235, 0.0
          %302 = vst.msk [vmem:[#allocation6 + $0x10] sm:$0xff] %vm235, 0.0
          %303 = vst.msk [vmem:[#allocation6 + $0x18] sm:$0xff] %vm235, 0.0
          %304 = vst.msk [vmem:[#allocation6 + $0x20] sm:$0xff] %vm235, 0.0
          %305 = vst.msk [vmem:[#allocation6 + $0x28] sm:$0xff] %vm235, 0.0
          %306 = vst.msk [vmem:[#allocation6 + $0x30] sm:$0xff] %vm235, 0.0
          %307 = vst.msk [vmem:[#allocation6 + $0x38] sm:$0xff] %vm235, 0.0
          %308 = vst.msk [vmem:[#allocation6 + $0x40] sm:$0xff] %vm235, 0.0
          %309 = vst.msk [vmem:[#allocation6 + $0x48] sm:$0xff] %vm235, 0.0
          %310 = vst.msk [vmem:[#allocation6 + $0x50] sm:$0xff] %vm235, 0.0
          %311 = vst.msk [vmem:[#allocation6 + $0x58] sm:$0xff] %vm235, 0.0
          %312 = vst.msk [vmem:[#allocation6 + $0x60] sm:$0xff] %vm235, 0.0
          %313 = vst.msk [vmem:[#allocation6 + $0x68] sm:$0xff] %vm235, 0.0
          %314 = vst.msk [vmem:[#allocation6 + $0x70] sm:$0xff] %vm235, 0.0
          %315 = vst.msk [vmem:[#allocation6 + $0x78] sm:$0xff] %vm235, 0.0
        $region40: #{tpu_custom_call.1} parent=27 // pred_fallthru
          _
        %v316 = vld [vmem:[%s186] sm:$0xff]
        %v317 = vld [vmem:[%s186 + $0x8] sm:$0xff]
        %v318 = vld [vmem:[%s186 + $0x10] sm:$0xff]
        %v319 = vld [vmem:[%s186 + $0x18] sm:$0xff]
        %v320 = vld [vmem:[%s186 + $0x20] sm:$0xff]
        %v321 = vld [vmem:[%s186 + $0x28] sm:$0xff]
        %v322 = vld [vmem:[%s186 + $0x30] sm:$0xff]
        %v323 = vld [vmem:[%s186 + $0x38] sm:$0xff]
        %v324 = vld [vmem:[%s186 + $0x40] sm:$0xff]
        %v325 = vld [vmem:[%s186 + $0x48] sm:$0xff]
        %v326 = vld [vmem:[%s186 + $0x50] sm:$0xff]
        %v327 = vld [vmem:[%s186 + $0x58] sm:$0xff]
        %v328 = vld [vmem:[%s186 + $0x60] sm:$0xff]
        %v329 = vld [vmem:[%s186 + $0x68] sm:$0xff]
        %v330 = vld [vmem:[%s186 + $0x70] sm:$0xff]
        %v331 = vld [vmem:[%s186 + $0x78] sm:$0xff]
        %v332 = vld [vmem:[%s186 + $0x80] sm:$0xff]
        %v333 = vld [vmem:[%s186 + $0x88] sm:$0xff]
        %v334 = vld [vmem:[%s186 + $0x90] sm:$0xff]
        %v335 = vld [vmem:[%s186 + $0x98] sm:$0xff]
        %v336 = vld [vmem:[%s186 + $0xa0] sm:$0xff]
        %v337 = vld [vmem:[%s186 + $0xa8] sm:$0xff]
        %v338 = vld [vmem:[%s186 + $0xb0] sm:$0xff]
        %v339 = vld [vmem:[%s186 + $0xb8] sm:$0xff]
        %v340 = vld [vmem:[%s186 + $0xc0] sm:$0xff]
        %v341 = vld [vmem:[%s186 + $0xc8] sm:$0xff]
        %v342 = vld [vmem:[%s186 + $0xd0] sm:$0xff]
        %v343 = vld [vmem:[%s186 + $0xd8] sm:$0xff]
        %v344 = vld [vmem:[%s186 + $0xe0] sm:$0xff]
        %v345 = vld [vmem:[%s186 + $0xe8] sm:$0xff]
        %v346 = vld [vmem:[%s186 + $0xf0] sm:$0xff]
        %v347 = vld [vmem:[%s186 + $0xf8] sm:$0xff]
        %v348 = vld [vmem:[%s186 + $0x100] sm:$0xff]
        %v349 = vld [vmem:[%s186 + $0x108] sm:$0xff]
        %v350 = vld [vmem:[%s186 + $0x110] sm:$0xff]
        %v351 = vld [vmem:[%s186 + $0x118] sm:$0xff]
        %v352 = vld [vmem:[%s186 + $0x120] sm:$0xff]
        %v353 = vld [vmem:[%s186 + $0x128] sm:$0xff]
        %v354 = vld [vmem:[%s186 + $0x130] sm:$0xff]
        %v355 = vld [vmem:[%s186 + $0x138] sm:$0xff]
        %v356 = vld [vmem:[%s186 + $0x140] sm:$0xff]
        %v357 = vld [vmem:[%s186 + $0x148] sm:$0xff]
        %v358 = vld [vmem:[%s186 + $0x150] sm:$0xff]
        %v359 = vld [vmem:[%s186 + $0x158] sm:$0xff]
        %v360 = vld [vmem:[%s186 + $0x160] sm:$0xff]
        %v361 = vld [vmem:[%s186 + $0x168] sm:$0xff]
        %v362 = vld [vmem:[%s186 + $0x170] sm:$0xff]
        %v363 = vld [vmem:[%s186 + $0x178] sm:$0xff]
        %v364 = vld [vmem:[%s186 + $0x180] sm:$0xff]
        %v365 = vld [vmem:[%s186 + $0x188] sm:$0xff]
        %v366 = vld [vmem:[%s186 + $0x190] sm:$0xff]
        %v367 = vld [vmem:[%s186 + $0x198] sm:$0xff]
        %v368 = vld [vmem:[%s186 + $0x1a0] sm:$0xff]
        %v369 = vld [vmem:[%s186 + $0x1a8] sm:$0xff]
        %v370 = vld [vmem:[%s186 + $0x1b0] sm:$0xff]
        %v371 = vld [vmem:[%s186 + $0x1b8] sm:$0xff]
        %v372 = vld [vmem:[%s186 + $0x1c0] sm:$0xff]
        %v373 = vld [vmem:[%s186 + $0x1c8] sm:$0xff]
        %v374 = vld [vmem:[%s186 + $0x1d0] sm:$0xff]
        %v375 = vld [vmem:[%s186 + $0x1d8] sm:$0xff]
        %v376 = vld [vmem:[%s186 + $0x1e0] sm:$0xff]
        %v377 = vld [vmem:[%s186 + $0x1e8] sm:$0xff]
        %v378 = vld [vmem:[%s186 + $0x1f0] sm:$0xff]
        %v379 = vld [vmem:[%s186 + $0x1f8] sm:$0xff]
        %v380 = vld [vmem:[%s186 + $0x200] sm:$0xff]
        %v381 = vld [vmem:[%s186 + $0x208] sm:$0xff]
        %v382 = vld [vmem:[%s186 + $0x210] sm:$0xff]
        %v383 = vld [vmem:[%s186 + $0x218] sm:$0xff]
        %v384 = vld [vmem:[%s186 + $0x220] sm:$0xff]
        %v385 = vld [vmem:[%s186 + $0x228] sm:$0xff]
        %v386 = vld [vmem:[%s186 + $0x230] sm:$0xff]
        %v387 = vld [vmem:[%s186 + $0x238] sm:$0xff]
        %v388 = vld [vmem:[%s186 + $0x240] sm:$0xff]
        %v389 = vld [vmem:[%s186 + $0x248] sm:$0xff]
        %v390 = vld [vmem:[%s186 + $0x250] sm:$0xff]
        %v391 = vld [vmem:[%s186 + $0x258] sm:$0xff]
        %v392 = vld [vmem:[%s186 + $0x260] sm:$0xff]
        %v393 = vld [vmem:[%s186 + $0x268] sm:$0xff]
        %v394 = vld [vmem:[%s186 + $0x270] sm:$0xff]
        %v395 = vld [vmem:[%s186 + $0x278] sm:$0xff]
        %v396 = vld [vmem:[%s195] sm:$0xff]
        %v397 = vld [vmem:[%s195 + $0x8] sm:$0xff]
        %v398 = vld [vmem:[%s195 + $0x10] sm:$0xff]
        %v399 = vld [vmem:[%s195 + $0x18] sm:$0xff]
        %v400 = vld [vmem:[%s195 + $0x20] sm:$0xff]
        %v401 = vld [vmem:[%s195 + $0x28] sm:$0xff]
        %v402 = vld [vmem:[%s195 + $0x30] sm:$0xff]
        %v403 = vld [vmem:[%s195 + $0x38] sm:$0xff]
        %v404 = vld [vmem:[%s195 + $0x40] sm:$0xff]
        %v405 = vld [vmem:[%s195 + $0x48] sm:$0xff]
        %v406 = vld [vmem:[%s195 + $0x50] sm:$0xff]
        %v407 = vld [vmem:[%s195 + $0x58] sm:$0xff]
        %v408 = vld [vmem:[%s195 + $0x60] sm:$0xff]
        %v409 = vld [vmem:[%s195 + $0x68] sm:$0xff]
        %v410 = vld [vmem:[%s195 + $0x70] sm:$0xff]
        %v411 = vld [vmem:[%s195 + $0x78] sm:$0xff]
        %v412 = vld [vmem:[%s195 + $0x80] sm:$0xff]
        %v413 = vld [vmem:[%s195 + $0x88] sm:$0xff]
        %v414 = vld [vmem:[%s195 + $0x90] sm:$0xff]
        %v415 = vld [vmem:[%s195 + $0x98] sm:$0xff]
        %v416 = vld [vmem:[%s195 + $0xa0] sm:$0xff]
        %v417 = vld [vmem:[%s195 + $0xa8] sm:$0xff]
        %v418 = vld [vmem:[%s195 + $0xb0] sm:$0xff]
        %v419 = vld [vmem:[%s195 + $0xb8] sm:$0xff]
        %v420 = vld [vmem:[%s195 + $0xc0] sm:$0xff]
        %v421 = vld [vmem:[%s195 + $0xc8] sm:$0xff]
        %v422 = vld [vmem:[%s195 + $0xd0] sm:$0xff]
        %v423 = vld [vmem:[%s195 + $0xd8] sm:$0xff]
        %v424 = vld [vmem:[%s195 + $0xe0] sm:$0xff]
        %v425 = vld [vmem:[%s195 + $0xe8] sm:$0xff]
        %v426 = vld [vmem:[%s195 + $0xf0] sm:$0xff]
        %v427 = vld [vmem:[%s195 + $0xf8] sm:$0xff]
        %v428 = vld [vmem:[%s195 + $0x100] sm:$0xff]
        %v429 = vld [vmem:[%s195 + $0x108] sm:$0xff]
        %v430 = vld [vmem:[%s195 + $0x110] sm:$0xff]
        %v431 = vld [vmem:[%s195 + $0x118] sm:$0xff]
        %v432 = vld [vmem:[%s195 + $0x120] sm:$0xff]
        %v433 = vld [vmem:[%s195 + $0x128] sm:$0xff]
        %v434 = vld [vmem:[%s195 + $0x130] sm:$0xff]
        %v435 = vld [vmem:[%s195 + $0x138] sm:$0xff]
        %v436 = vld [vmem:[%s195 + $0x140] sm:$0xff]
        %v437 = vld [vmem:[%s195 + $0x148] sm:$0xff]
        %v438 = vld [vmem:[%s195 + $0x150] sm:$0xff]
        %v439 = vld [vmem:[%s195 + $0x158] sm:$0xff]
        %v440 = vld [vmem:[%s195 + $0x160] sm:$0xff]
        %v441 = vld [vmem:[%s195 + $0x168] sm:$0xff]
        %v442 = vld [vmem:[%s195 + $0x170] sm:$0xff]
        %v443 = vld [vmem:[%s195 + $0x178] sm:$0xff]
        %v444 = vld [vmem:[%s195 + $0x180] sm:$0xff]
        %v445 = vld [vmem:[%s195 + $0x188] sm:$0xff]
        %v446 = vld [vmem:[%s195 + $0x190] sm:$0xff]
        %v447 = vld [vmem:[%s195 + $0x198] sm:$0xff]
        %v448 = vld [vmem:[%s195 + $0x1a0] sm:$0xff]
        %v449 = vld [vmem:[%s195 + $0x1a8] sm:$0xff]
        %v450 = vld [vmem:[%s195 + $0x1b0] sm:$0xff]
        %v451 = vld [vmem:[%s195 + $0x1b8] sm:$0xff]
        %v452 = vld [vmem:[%s195 + $0x1c0] sm:$0xff]
        %v453 = vld [vmem:[%s195 + $0x1c8] sm:$0xff]
        %v454 = vld [vmem:[%s195 + $0x1d0] sm:$0xff]
        %v455 = vld [vmem:[%s195 + $0x1d8] sm:$0xff]
        %v456 = vld [vmem:[%s195 + $0x1e0] sm:$0xff]
        %v457 = vld [vmem:[%s195 + $0x1e8] sm:$0xff]
        %v458 = vld [vmem:[%s195 + $0x1f0] sm:$0xff]
        %v459 = vld [vmem:[%s195 + $0x1f8] sm:$0xff]
        %v460 = vld [vmem:[%s195 + $0x200] sm:$0xff]
        %v461 = vld [vmem:[%s195 + $0x208] sm:$0xff]
        %v462 = vld [vmem:[%s195 + $0x210] sm:$0xff]
        %v463 = vld [vmem:[%s195 + $0x218] sm:$0xff]
        %v464 = vld [vmem:[%s195 + $0x220] sm:$0xff]
        %v465 = vld [vmem:[%s195 + $0x228] sm:$0xff]
        %v466 = vld [vmem:[%s195 + $0x230] sm:$0xff]
        %v467 = vld [vmem:[%s195 + $0x238] sm:$0xff]
        %v468 = vld [vmem:[%s195 + $0x240] sm:$0xff]
        %v469 = vld [vmem:[%s195 + $0x248] sm:$0xff]
        %v470 = vld [vmem:[%s195 + $0x250] sm:$0xff]
        %v471 = vld [vmem:[%s195 + $0x258] sm:$0xff]
        %v472 = vld [vmem:[%s195 + $0x260] sm:$0xff]
        %v473 = vld [vmem:[%s195 + $0x268] sm:$0xff]
        %v474 = vld [vmem:[%s195 + $0x270] sm:$0xff]
        %v475 = vld [vmem:[%s195 + $0x278] sm:$0xff]
        %v476 = vsub.f32 %v396, %v316
        %v477 = vsub.f32 %v397, %v317
        %v478 = vsub.f32 %v398, %v318
        %v479 = vsub.f32 %v399, %v319
        %v480 = vsub.f32 %v400, %v320
        %v481 = vsub.f32 %v401, %v321
        %v482 = vsub.f32 %v402, %v322
        %v483 = vsub.f32 %v403, %v323
        %v484 = vsub.f32 %v404, %v324
        %v485 = vsub.f32 %v405, %v325
        %v486 = vsub.f32 %v406, %v326
        %v487 = vsub.f32 %v407, %v327
        %v488 = vsub.f32 %v408, %v328
        %v489 = vsub.f32 %v409, %v329
        %v490 = vsub.f32 %v410, %v330
        %v491 = vsub.f32 %v411, %v331
        %v492 = vsub.f32 %v412, %v332
        %v493 = vsub.f32 %v413, %v333
        %v494 = vsub.f32 %v414, %v334
        %v495 = vsub.f32 %v415, %v335
        %v496 = vsub.f32 %v416, %v336
        %v497 = vsub.f32 %v417, %v337
        %v498 = vsub.f32 %v418, %v338
        %v499 = vsub.f32 %v419, %v339
        %v500 = vsub.f32 %v420, %v340
        %v501 = vsub.f32 %v421, %v341
        %v502 = vsub.f32 %v422, %v342
        %v503 = vsub.f32 %v423, %v343
        %v504 = vsub.f32 %v424, %v344
        %v505 = vsub.f32 %v425, %v345
        %v506 = vsub.f32 %v426, %v346
        %v507 = vsub.f32 %v427, %v347
        %v508 = vsub.f32 %v428, %v348
        %v509 = vsub.f32 %v429, %v349
        %v510 = vsub.f32 %v430, %v350
        %v511 = vsub.f32 %v431, %v351
        %v512 = vsub.f32 %v432, %v352
        %v513 = vsub.f32 %v433, %v353
        %v514 = vsub.f32 %v434, %v354
        %v515 = vsub.f32 %v435, %v355
        %v516 = vsub.f32 %v436, %v356
        %v517 = vsub.f32 %v437, %v357
        %v518 = vsub.f32 %v438, %v358
        %v519 = vsub.f32 %v439, %v359
        %v520 = vsub.f32 %v440, %v360
        %v521 = vsub.f32 %v441, %v361
        %v522 = vsub.f32 %v442, %v362
        %v523 = vsub.f32 %v443, %v363
        %v524 = vsub.f32 %v444, %v364
        %v525 = vsub.f32 %v445, %v365
        %v526 = vsub.f32 %v446, %v366
        %v527 = vsub.f32 %v447, %v367
        %v528 = vsub.f32 %v448, %v368
        %v529 = vsub.f32 %v449, %v369
        %v530 = vsub.f32 %v450, %v370
        %v531 = vsub.f32 %v451, %v371
        %v532 = vsub.f32 %v452, %v372
        %v533 = vsub.f32 %v453, %v373
        %v534 = vsub.f32 %v454, %v374
        %v535 = vsub.f32 %v455, %v375
        %v536 = vsub.f32 %v456, %v376
        %v537 = vsub.f32 %v457, %v377
        %v538 = vsub.f32 %v458, %v378
        %v539 = vsub.f32 %v459, %v379
        %v540 = vsub.f32 %v460, %v380
        %v541 = vsub.f32 %v461, %v381
        %v542 = vsub.f32 %v462, %v382
        %v543 = vsub.f32 %v463, %v383
        %v544 = vsub.f32 %v464, %v384
        %v545 = vsub.f32 %v465, %v385
        %v546 = vsub.f32 %v466, %v386
        %v547 = vsub.f32 %v467, %v387
        %v548 = vsub.f32 %v468, %v388
        %v549 = vsub.f32 %v469, %v389
        %v550 = vsub.f32 %v470, %v390
        %v551 = vsub.f32 %v471, %v391
        %v552 = vsub.f32 %v472, %v392
        %v553 = vsub.f32 %v473, %v393
        %v554 = vsub.f32 %v474, %v394
        %v555 = vsub.f32 %v475, %v395
        %v556 = vld [vmem:[#allocation2] sm:$0xff]
        %v557 = vld [vmem:[#allocation2 + $0x8] sm:$0xff]
        %v558 = vld [vmem:[#allocation2 + $0x10] sm:$0xff]
        %v559 = vld [vmem:[#allocation2 + $0x18] sm:$0xff]
        %v560 = vld [vmem:[#allocation2 + $0x20] sm:$0xff]
        %v561 = vld [vmem:[#allocation2 + $0x28] sm:$0xff]
        %v562 = vld [vmem:[#allocation2 + $0x30] sm:$0xff]
        %v563 = vld [vmem:[#allocation2 + $0x38] sm:$0xff]
        %v564 = vld [vmem:[#allocation2 + $0x40] sm:$0xff]
        %v565 = vld [vmem:[#allocation2 + $0x48] sm:$0xff]
        %v566 = vld [vmem:[#allocation2 + $0x50] sm:$0xff]
        %v567 = vld [vmem:[#allocation2 + $0x58] sm:$0xff]
        %v568 = vld [vmem:[#allocation2 + $0x60] sm:$0xff]
        %v569 = vld [vmem:[#allocation2 + $0x68] sm:$0xff]
        %v570 = vld [vmem:[#allocation2 + $0x70] sm:$0xff]
        %v571 = vld [vmem:[#allocation2 + $0x78] sm:$0xff]
        %v572 = vmax.f32 %v316, %v317
        %v573 = vmax.f32 %v572, %v318
        %v574 = vmax.f32 %v573, %v319
        %v575 = vmax.f32 %v574, %v320
        %576 = vmax.xlane.f32.xlu0 %v575
        %v577 = vpop.xlane.xlu0 %576
        %v578 = vmax.f32 %v321, %v322
        %v579 = vmax.f32 %v578, %v323
        %v580 = vmax.f32 %v579, %v324
        %v581 = vmax.f32 %v580, %v325
        %582 = vmax.xlane.f32.xlu0 %v581
        %v583 = vpop.xlane.xlu0 %582
        %v584 = vmax.f32 %v326, %v327
        %v585 = vmax.f32 %v584, %v328
        %v586 = vmax.f32 %v585, %v329
        %v587 = vmax.f32 %v586, %v330
        %588 = vmax.xlane.f32.xlu0 %v587
        %v589 = vpop.xlane.xlu0 %588
        %v590 = vmax.f32 %v331, %v332
        %v591 = vmax.f32 %v590, %v333
        %v592 = vmax.f32 %v591, %v334
        %v593 = vmax.f32 %v592, %v335
        %594 = vmax.xlane.f32.xlu0 %v593
        %v595 = vpop.xlane.xlu0 %594
        %v596 = vmax.f32 %v336, %v337
        %v597 = vmax.f32 %v596, %v338
        %v598 = vmax.f32 %v597, %v339
        %v599 = vmax.f32 %v598, %v340
        %600 = vmax.xlane.f32.xlu0 %v599
        %v601 = vpop.xlane.xlu0 %600
        %v602 = vmax.f32 %v341, %v342
        %v603 = vmax.f32 %v602, %v343
        %v604 = vmax.f32 %v603, %v344
        %v605 = vmax.f32 %v604, %v345
        %606 = vmax.xlane.f32.xlu0 %v605
        %v607 = vpop.xlane.xlu0 %606
        %v608 = vmax.f32 %v346, %v347
        %v609 = vmax.f32 %v608, %v348
        %v610 = vmax.f32 %v609, %v349
        %v611 = vmax.f32 %v610, %v350
        %612 = vmax.xlane.f32.xlu0 %v611
        %v613 = vpop.xlane.xlu0 %612
        %v614 = vmax.f32 %v351, %v352
        %v615 = vmax.f32 %v614, %v353
        %v616 = vmax.f32 %v615, %v354
        %v617 = vmax.f32 %v616, %v355
        %618 = vmax.xlane.f32.xlu0 %v617
        %v619 = vpop.xlane.xlu0 %618
        %v620 = vmax.f32 %v356, %v357
        %v621 = vmax.f32 %v620, %v358
        %v622 = vmax.f32 %v621, %v359
        %v623 = vmax.f32 %v622, %v360
        %624 = vmax.xlane.f32.xlu0 %v623
        %v625 = vpop.xlane.xlu0 %624
        %v626 = vmax.f32 %v361, %v362
        %v627 = vmax.f32 %v626, %v363
        %v628 = vmax.f32 %v627, %v364
        %v629 = vmax.f32 %v628, %v365
        %630 = vmax.xlane.f32.xlu0 %v629
        %v631 = vpop.xlane.xlu0 %630
        %v632 = vmax.f32 %v366, %v367
        %v633 = vmax.f32 %v632, %v368
        %v634 = vmax.f32 %v633, %v369
        %v635 = vmax.f32 %v634, %v370
        %636 = vmax.xlane.f32.xlu0 %v635
        %v637 = vpop.xlane.xlu0 %636
        %v638 = vmax.f32 %v371, %v372
        %v639 = vmax.f32 %v638, %v373
        %v640 = vmax.f32 %v639, %v374
        %v641 = vmax.f32 %v640, %v375
        %642 = vmax.xlane.f32.xlu0 %v641
        %v643 = vpop.xlane.xlu0 %642
        %v644 = vmax.f32 %v376, %v377
        %v645 = vmax.f32 %v644, %v378
        %v646 = vmax.f32 %v645, %v379
        %v647 = vmax.f32 %v646, %v380
        %648 = vmax.xlane.f32.xlu0 %v647
        %v649 = vpop.xlane.xlu0 %648
        %v650 = vmax.f32 %v381, %v382
        %v651 = vmax.f32 %v650, %v383
        %v652 = vmax.f32 %v651, %v384
        %v653 = vmax.f32 %v652, %v385
        %654 = vmax.xlane.f32.xlu0 %v653
        %v655 = vpop.xlane.xlu0 %654
        %v656 = vmax.f32 %v386, %v387
        %v657 = vmax.f32 %v656, %v388
        %v658 = vmax.f32 %v657, %v389
        %v659 = vmax.f32 %v658, %v390
        %660 = vmax.xlane.f32.xlu0 %v659
        %v661 = vpop.xlane.xlu0 %660
        %v662 = vmax.f32 %v391, %v392
        %v663 = vmax.f32 %v662, %v393
        %v664 = vmax.f32 %v663, %v394
        %v665 = vmax.f32 %v664, %v395
        %666 = vmax.xlane.f32.xlu0 %v665
        %v667 = vpop.xlane.xlu0 %666
        %v668 = vmax.f32 %v556, %v577
        %v669 = vmax.f32 %v557, %v583
        %v670 = vmax.f32 %v558, %v589
        %v671 = vmax.f32 %v559, %v595
        %v672 = vmax.f32 %v560, %v601
        %v673 = vmax.f32 %v561, %v607
        %v674 = vmax.f32 %v562, %v613
        %v675 = vmax.f32 %v563, %v619
        %v676 = vmax.f32 %v564, %v625
        %v677 = vmax.f32 %v565, %v631
        %v678 = vmax.f32 %v566, %v637
        %v679 = vmax.f32 %v567, %v643
        %v680 = vmax.f32 %v568, %v649
        %v681 = vmax.f32 %v569, %v655
        %v682 = vmax.f32 %v570, %v661
        %v683 = vmax.f32 %v571, %v667
        %v684 = vld [vmem:[#allocation3] sm:$0xff]
        %v685 = vld [vmem:[#allocation3 + $0x8] sm:$0xff]
        %v686 = vld [vmem:[#allocation3 + $0x10] sm:$0xff]
        %v687 = vld [vmem:[#allocation3 + $0x18] sm:$0xff]
        %v688 = vld [vmem:[#allocation3 + $0x20] sm:$0xff]
        %v689 = vld [vmem:[#allocation3 + $0x28] sm:$0xff]
        %v690 = vld [vmem:[#allocation3 + $0x30] sm:$0xff]
        %v691 = vld [vmem:[#allocation3 + $0x38] sm:$0xff]
        %v692 = vld [vmem:[#allocation3 + $0x40] sm:$0xff]
        %v693 = vld [vmem:[#allocation3 + $0x48] sm:$0xff]
        %v694 = vld [vmem:[#allocation3 + $0x50] sm:$0xff]
        %v695 = vld [vmem:[#allocation3 + $0x58] sm:$0xff]
        %v696 = vld [vmem:[#allocation3 + $0x60] sm:$0xff]
        %v697 = vld [vmem:[#allocation3 + $0x68] sm:$0xff]
        %v698 = vld [vmem:[#allocation3 + $0x70] sm:$0xff]
        %v699 = vld [vmem:[#allocation3 + $0x78] sm:$0xff]
        %v700 = vmax.f32 %v396, %v397
        %v701 = vmax.f32 %v700, %v398
        %v702 = vmax.f32 %v701, %v399
        %v703 = vmax.f32 %v702, %v400
        %704 = vmax.xlane.f32.xlu0 %v703
        %v705 = vpop.xlane.xlu0 %704
        %v706 = vmax.f32 %v401, %v402
        %v707 = vmax.f32 %v706, %v403
        %v708 = vmax.f32 %v707, %v404
        %v709 = vmax.f32 %v708, %v405
        %710 = vmax.xlane.f32.xlu0 %v709
        %v711 = vpop.xlane.xlu0 %710
        %v712 = vmax.f32 %v406, %v407
        %v713 = vmax.f32 %v712, %v408
        %v714 = vmax.f32 %v713, %v409
        %v715 = vmax.f32 %v714, %v410
        %716 = vmax.xlane.f32.xlu0 %v715
        %v717 = vpop.xlane.xlu0 %716
        %v718 = vmax.f32 %v411, %v412
        %v719 = vmax.f32 %v718, %v413
        %v720 = vmax.f32 %v719, %v414
        %v721 = vmax.f32 %v720, %v415
        %722 = vmax.xlane.f32.xlu0 %v721
        %v723 = vpop.xlane.xlu0 %722
        %v724 = vmax.f32 %v416, %v417
        %v725 = vmax.f32 %v724, %v418
        %v726 = vmax.f32 %v725, %v419
        %v727 = vmax.f32 %v726, %v420
        %728 = vmax.xlane.f32.xlu0 %v727
        %v729 = vpop.xlane.xlu0 %728
        %v730 = vmax.f32 %v421, %v422
        %v731 = vmax.f32 %v730, %v423
        %v732 = vmax.f32 %v731, %v424
        %v733 = vmax.f32 %v732, %v425
        %734 = vmax.xlane.f32.xlu0 %v733
        %v735 = vpop.xlane.xlu0 %734
        %v736 = vmax.f32 %v426, %v427
        %v737 = vmax.f32 %v736, %v428
        %v738 = vmax.f32 %v737, %v429
        %v739 = vmax.f32 %v738, %v430
        %740 = vmax.xlane.f32.xlu0 %v739
        %v741 = vpop.xlane.xlu0 %740
        %v742 = vmax.f32 %v431, %v432
        %v743 = vmax.f32 %v742, %v433
        %v744 = vmax.f32 %v743, %v434
        %v745 = vmax.f32 %v744, %v435
        %746 = vmax.xlane.f32.xlu0 %v745
        %v747 = vpop.xlane.xlu0 %746
        %v748 = vmax.f32 %v436, %v437
        %v749 = vmax.f32 %v748, %v438
        %v750 = vmax.f32 %v749, %v439
        %v751 = vmax.f32 %v750, %v440
        %752 = vmax.xlane.f32.xlu0 %v751
        %v753 = vpop.xlane.xlu0 %752
        %v754 = vmax.f32 %v441, %v442
        %v755 = vmax.f32 %v754, %v443
        %v756 = vmax.f32 %v755, %v444
        %v757 = vmax.f32 %v756, %v445
        %758 = vmax.xlane.f32.xlu0 %v757
        %v759 = vpop.xlane.xlu0 %758
        %v760 = vmax.f32 %v446, %v447
        %v761 = vmax.f32 %v760, %v448
        %v762 = vmax.f32 %v761, %v449
        %v763 = vmax.f32 %v762, %v450
        %764 = vmax.xlane.f32.xlu0 %v763
        %v765 = vpop.xlane.xlu0 %764
        %v766 = vmax.f32 %v451, %v452
        %v767 = vmax.f32 %v766, %v453
        %v768 = vmax.f32 %v767, %v454
        %v769 = vmax.f32 %v768, %v455
        %770 = vmax.xlane.f32.xlu0 %v769
        %v771 = vpop.xlane.xlu0 %770
        %v772 = vmax.f32 %v456, %v457
        %v773 = vmax.f32 %v772, %v458
        %v774 = vmax.f32 %v773, %v459
        %v775 = vmax.f32 %v774, %v460
        %776 = vmax.xlane.f32.xlu0 %v775
        %v777 = vpop.xlane.xlu0 %776
        %v778 = vmax.f32 %v461, %v462
        %v779 = vmax.f32 %v778, %v463
        %v780 = vmax.f32 %v779, %v464
        %v781 = vmax.f32 %v780, %v465
        %782 = vmax.xlane.f32.xlu0 %v781
        %v783 = vpop.xlane.xlu0 %782
        %v784 = vmax.f32 %v466, %v467
        %v785 = vmax.f32 %v784, %v468
        %v786 = vmax.f32 %v785, %v469
        %v787 = vmax.f32 %v786, %v470
        %788 = vmax.xlane.f32.xlu0 %v787
        %v789 = vpop.xlane.xlu0 %788
        %v790 = vmax.f32 %v471, %v472
        %v791 = vmax.f32 %v790, %v473
        %v792 = vmax.f32 %v791, %v474
        %v793 = vmax.f32 %v792, %v475
        %794 = vmax.xlane.f32.xlu0 %v793
        %v795 = vpop.xlane.xlu0 %794
        %v796 = vmax.f32 %v684, %v705
        %v797 = vmax.f32 %v685, %v711
        %v798 = vmax.f32 %v686, %v717
        %v799 = vmax.f32 %v687, %v723
        %v800 = vmax.f32 %v688, %v729
        %v801 = vmax.f32 %v689, %v735
        %v802 = vmax.f32 %v690, %v741
        %v803 = vmax.f32 %v691, %v747
        %v804 = vmax.f32 %v692, %v753
        %v805 = vmax.f32 %v693, %v759
        %v806 = vmax.f32 %v694, %v765
        %v807 = vmax.f32 %v695, %v771
        %v808 = vmax.f32 %v696, %v777
        %v809 = vmax.f32 %v697, %v783
        %v810 = vmax.f32 %v698, %v789
        %v811 = vmax.f32 %v699, %v795
        %v812 = vsub.f32 %v556, %v668
        %v813 = vsub.f32 %v557, %v669
        %v814 = vsub.f32 %v558, %v670
        %v815 = vsub.f32 %v559, %v671
        %v816 = vsub.f32 %v560, %v672
        %v817 = vsub.f32 %v561, %v673
        %v818 = vsub.f32 %v562, %v674
        %v819 = vsub.f32 %v563, %v675
        %v820 = vsub.f32 %v564, %v676
        %v821 = vsub.f32 %v565, %v677
        %v822 = vsub.f32 %v566, %v678
        %v823 = vsub.f32 %v567, %v679
        %v824 = vsub.f32 %v568, %v680
        %v825 = vsub.f32 %v569, %v681
        %v826 = vsub.f32 %v570, %v682
        %v827 = vsub.f32 %v571, %v683
        %v828 = vmul.f32 %v812, 1.442695
        %v829 = vpow.pop %v828
        %v830 = vmul.f32 %v813, 1.442695
        %v831 = vpow.pop %v830
        %v832 = vmul.f32 %v814, 1.442695
        %v833 = vpow.pop %v832
        %v834 = vmul.f32 %v815, 1.442695
        %v835 = vpow.pop %v834
        %v836 = vmul.f32 %v816, 1.442695
        %v837 = vpow.pop %v836
        %v838 = vmul.f32 %v817, 1.442695
        %v839 = vpow.pop %v838
        %v840 = vmul.f32 %v818, 1.442695
        %v841 = vpow.pop %v840
        %v842 = vmul.f32 %v819, 1.442695
        %v843 = vpow.pop %v842
        %v844 = vmul.f32 %v820, 1.442695
        %v845 = vpow.pop %v844
        %v846 = vmul.f32 %v821, 1.442695
        %v847 = vpow.pop %v846
        %v848 = vmul.f32 %v822, 1.442695
        %v849 = vpow.pop %v848
        %v850 = vmul.f32 %v823, 1.442695
        %v851 = vpow.pop %v850
        %v852 = vmul.f32 %v824, 1.442695
        %v853 = vpow.pop %v852
        %v854 = vmul.f32 %v825, 1.442695
        %v855 = vpow.pop %v854
        %v856 = vmul.f32 %v826, 1.442695
        %v857 = vpow.pop %v856
        %v858 = vmul.f32 %v827, 1.442695
        %v859 = vpow.pop %v858
        %v860 = vsub.f32 %v684, %v796
        %v861 = vsub.f32 %v685, %v797
        %v862 = vsub.f32 %v686, %v798
        %v863 = vsub.f32 %v687, %v799
        %v864 = vsub.f32 %v688, %v800
        %v865 = vsub.f32 %v689, %v801
        %v866 = vsub.f32 %v690, %v802
        %v867 = vsub.f32 %v691, %v803
        %v868 = vsub.f32 %v692, %v804
        %v869 = vsub.f32 %v693, %v805
        %v870 = vsub.f32 %v694, %v806
        %v871 = vsub.f32 %v695, %v807
        %v872 = vsub.f32 %v696, %v808
        %v873 = vsub.f32 %v697, %v809
        %v874 = vsub.f32 %v698, %v810
        %v875 = vsub.f32 %v699, %v811
        %v876 = vmul.f32 %v860, 1.442695
        %v877 = vpow.pop %v876
        %v878 = vmul.f32 %v861, 1.442695
        %v879 = vpow.pop %v878
        %v880 = vmul.f32 %v862, 1.442695
        %v881 = vpow.pop %v880
        %v882 = vmul.f32 %v863, 1.442695
        %v883 = vpow.pop %v882
        %v884 = vmul.f32 %v864, 1.442695
        %v885 = vpow.pop %v884
        %v886 = vmul.f32 %v865, 1.442695
        %v887 = vpow.pop %v886
        %v888 = vmul.f32 %v866, 1.442695
        %v889 = vpow.pop %v888
        %v890 = vmul.f32 %v867, 1.442695
        %v891 = vpow.pop %v890
        %v892 = vmul.f32 %v868, 1.442695
        %v893 = vpow.pop %v892
        %v894 = vmul.f32 %v869, 1.442695
        %v895 = vpow.pop %v894
        %v896 = vmul.f32 %v870, 1.442695
        %v897 = vpow.pop %v896
        %v898 = vmul.f32 %v871, 1.442695
        %v899 = vpow.pop %v898
        %v900 = vmul.f32 %v872, 1.442695
        %v901 = vpow.pop %v900
        %v902 = vmul.f32 %v873, 1.442695
        %v903 = vpow.pop %v902
        %v904 = vmul.f32 %v874, 1.442695
        %v905 = vpow.pop %v904
        %v906 = vmul.f32 %v875, 1.442695
        %v907 = vpow.pop %v906
        %909 = vset.pattern.permute.xlu0 0
        %910 = vperm.xlu0 %909, %v668
        %v911 = vpop.permute.xlu0 %910
        %914 = vset.pattern.permute.xlu0 0
        %915 = vperm.xlu0 %914, %v669
        %v916 = vpop.permute.xlu0 %915
        %919 = vset.pattern.permute.xlu0 0
        %920 = vperm.xlu0 %919, %v670
        %v921 = vpop.permute.xlu0 %920
        %924 = vset.pattern.permute.xlu0 0
        %925 = vperm.xlu0 %924, %v671
        %v926 = vpop.permute.xlu0 %925
        %929 = vset.pattern.permute.xlu0 0
        %930 = vperm.xlu0 %929, %v672
        %v931 = vpop.permute.xlu0 %930
        %934 = vset.pattern.permute.xlu0 0
        %935 = vperm.xlu0 %934, %v673
        %v936 = vpop.permute.xlu0 %935
        %939 = vset.pattern.permute.xlu0 0
        %940 = vperm.xlu0 %939, %v674
        %v941 = vpop.permute.xlu0 %940
        %944 = vset.pattern.permute.xlu0 0
        %945 = vperm.xlu0 %944, %v675
        %v946 = vpop.permute.xlu0 %945
        %949 = vset.pattern.permute.xlu0 0
        %950 = vperm.xlu0 %949, %v676
        %v951 = vpop.permute.xlu0 %950
        %954 = vset.pattern.permute.xlu0 0
        %955 = vperm.xlu0 %954, %v677
        %v956 = vpop.permute.xlu0 %955
        %959 = vset.pattern.permute.xlu0 0
        %960 = vperm.xlu0 %959, %v678
        %v961 = vpop.permute.xlu0 %960
        %964 = vset.pattern.permute.xlu0 0
        %965 = vperm.xlu0 %964, %v679
        %v966 = vpop.permute.xlu0 %965
        %969 = vset.pattern.permute.xlu0 0
        %970 = vperm.xlu0 %969, %v680
        %v971 = vpop.permute.xlu0 %970
        %974 = vset.pattern.permute.xlu0 0
        %975 = vperm.xlu0 %974, %v681
        %v976 = vpop.permute.xlu0 %975
        %979 = vset.pattern.permute.xlu0 0
        %980 = vperm.xlu0 %979, %v682
        %v981 = vpop.permute.xlu0 %980
        %984 = vset.pattern.permute.xlu0 0
        %985 = vperm.xlu0 %984, %v683
        %v986 = vpop.permute.xlu0 %985
        %v988 = vsub.f32 %v316, %v911
        %v989 = vsub.f32 %v317, %v911
        %v990 = vsub.f32 %v318, %v911
        %v991 = vsub.f32 %v319, %v911
        %v992 = vsub.f32 %v320, %v911
        %v993 = vsub.f32 %v321, %v916
        %v994 = vsub.f32 %v322, %v916
        %v995 = vsub.f32 %v323, %v916
        %v996 = vsub.f32 %v324, %v916
        %v997 = vsub.f32 %v325, %v916
        %v998 = vsub.f32 %v326, %v921
        %v999 = vsub.f32 %v327, %v921
        %v1000 = vsub.f32 %v328, %v921
        %v1001 = vsub.f32 %v329, %v921
        %v1002 = vsub.f32 %v330, %v921
        %v1003 = vsub.f32 %v331, %v926
        %v1004 = vsub.f32 %v332, %v926
        %v1005 = vsub.f32 %v333, %v926
        %v1006 = vsub.f32 %v334, %v926
        %v1007 = vsub.f32 %v335, %v926
        %v1008 = vsub.f32 %v336, %v931
        %v1009 = vsub.f32 %v337, %v931
        %v1010 = vsub.f32 %v338, %v931
        %v1011 = vsub.f32 %v339, %v931
        %v1012 = vsub.f32 %v340, %v931
        %v1013 = vsub.f32 %v341, %v936
        %v1014 = vsub.f32 %v342, %v936
        %v1015 = vsub.f32 %v343, %v936
        %v1016 = vsub.f32 %v344, %v936
        %v1017 = vsub.f32 %v345, %v936
        %v1018 = vsub.f32 %v346, %v941
        %v1019 = vsub.f32 %v347, %v941
        %v1020 = vsub.f32 %v348, %v941
        %v1021 = vsub.f32 %v349, %v941
        %v1022 = vsub.f32 %v350, %v941
        %v1023 = vsub.f32 %v351, %v946
        %v1024 = vsub.f32 %v352, %v946
        %v1025 = vsub.f32 %v353, %v946
        %v1026 = vsub.f32 %v354, %v946
        %v1027 = vsub.f32 %v355, %v946
        %v1028 = vsub.f32 %v356, %v951
        %v1029 = vsub.f32 %v357, %v951
        %v1030 = vsub.f32 %v358, %v951
        %v1031 = vsub.f32 %v359, %v951
        %v1032 = vsub.f32 %v360, %v951
        %v1033 = vsub.f32 %v361, %v956
        %v1034 = vsub.f32 %v362, %v956
        %v1035 = vsub.f32 %v363, %v956
        %v1036 = vsub.f32 %v364, %v956
        %v1037 = vsub.f32 %v365, %v956
        %v1038 = vsub.f32 %v366, %v961
        %v1039 = vsub.f32 %v367, %v961
        %v1040 = vsub.f32 %v368, %v961
        %v1041 = vsub.f32 %v369, %v961
        %v1042 = vsub.f32 %v370, %v961
        %v1043 = vsub.f32 %v371, %v966
        %v1044 = vsub.f32 %v372, %v966
        %v1045 = vsub.f32 %v373, %v966
        %v1046 = vsub.f32 %v374, %v966
        %v1047 = vsub.f32 %v375, %v966
        %v1048 = vsub.f32 %v376, %v971
        %v1049 = vsub.f32 %v377, %v971
        %v1050 = vsub.f32 %v378, %v971
        %v1051 = vsub.f32 %v379, %v971
        %v1052 = vsub.f32 %v380, %v971
        %v1053 = vsub.f32 %v381, %v976
        %v1054 = vsub.f32 %v382, %v976
        %v1055 = vsub.f32 %v383, %v976
        %v1056 = vsub.f32 %v384, %v976
        %v1057 = vsub.f32 %v385, %v976
        %v1058 = vsub.f32 %v386, %v981
        %v1059 = vsub.f32 %v387, %v981
        %v1060 = vsub.f32 %v388, %v981
        %v1061 = vsub.f32 %v389, %v981
        %v1062 = vsub.f32 %v390, %v981
        %v1063 = vsub.f32 %v391, %v986
        %v1064 = vsub.f32 %v392, %v986
        %v1065 = vsub.f32 %v393, %v986
        %v1066 = vsub.f32 %v394, %v986
        %v1067 = vsub.f32 %v395, %v986
        %v1068 = vmul.f32 %v988, 1.442695
        %v1069 = vpow.pop %v1068
        %v1070 = vmul.f32 %v989, 1.442695
        %v1071 = vpow.pop %v1070
        %v1072 = vmul.f32 %v990, 1.442695
        %v1073 = vpow.pop %v1072
        %v1074 = vmul.f32 %v991, 1.442695
        %v1075 = vpow.pop %v1074
        %v1076 = vmul.f32 %v992, 1.442695
        %v1077 = vpow.pop %v1076
        %v1078 = vmul.f32 %v993, 1.442695
        %v1079 = vpow.pop %v1078
        %v1080 = vmul.f32 %v994, 1.442695
        %v1081 = vpow.pop %v1080
        %v1082 = vmul.f32 %v995, 1.442695
        %v1083 = vpow.pop %v1082
        %v1084 = vmul.f32 %v996, 1.442695
        %v1085 = vpow.pop %v1084
        %v1086 = vmul.f32 %v997, 1.442695
        %v1087 = vpow.pop %v1086
        %v1088 = vmul.f32 %v998, 1.442695
        %v1089 = vpow.pop %v1088
        %v1090 = vmul.f32 %v999, 1.442695
        %v1091 = vpow.pop %v1090
        %v1092 = vmul.f32 %v1000, 1.442695
        %v1093 = vpow.pop %v1092
        %v1094 = vmul.f32 %v1001, 1.442695
        %v1095 = vpow.pop %v1094
        %v1096 = vmul.f32 %v1002, 1.442695
        %v1097 = vpow.pop %v1096
        %v1098 = vmul.f32 %v1003, 1.442695
        %v1099 = vpow.pop %v1098
        %v1100 = vmul.f32 %v1004, 1.442695
        %v1101 = vpow.pop %v1100
        %v1102 = vmul.f32 %v1005, 1.442695
        %v1103 = vpow.pop %v1102
        %v1104 = vmul.f32 %v1006, 1.442695
        %v1105 = vpow.pop %v1104
        %v1106 = vmul.f32 %v1007, 1.442695
        %v1107 = vpow.pop %v1106
        %v1108 = vmul.f32 %v1008, 1.442695
        %v1109 = vpow.pop %v1108
        %v1110 = vmul.f32 %v1009, 1.442695
        %v1111 = vpow.pop %v1110
        %v1112 = vmul.f32 %v1010, 1.442695
        %v1113 = vpow.pop %v1112
        %v1114 = vmul.f32 %v1011, 1.442695
        %v1115 = vpow.pop %v1114
        %v1116 = vmul.f32 %v1012, 1.442695
        %v1117 = vpow.pop %v1116
        %v1118 = vmul.f32 %v1013, 1.442695
        %v1119 = vpow.pop %v1118
        %v1120 = vmul.f32 %v1014, 1.442695
        %v1121 = vpow.pop %v1120
        %v1122 = vmul.f32 %v1015, 1.442695
        %v1123 = vpow.pop %v1122
        %v1124 = vmul.f32 %v1016, 1.442695
        %v1125 = vpow.pop %v1124
        %v1126 = vmul.f32 %v1017, 1.442695
        %v1127 = vpow.pop %v1126
        %v1128 = vmul.f32 %v1018, 1.442695
        %v1129 = vpow.pop %v1128
        %v1130 = vmul.f32 %v1019, 1.442695
        %v1131 = vpow.pop %v1130
        %v1132 = vmul.f32 %v1020, 1.442695
        %v1133 = vpow.pop %v1132
        %v1134 = vmul.f32 %v1021, 1.442695
        %v1135 = vpow.pop %v1134
        %v1136 = vmul.f32 %v1022, 1.442695
        %v1137 = vpow.pop %v1136
        %v1138 = vmul.f32 %v1023, 1.442695
        %v1139 = vpow.pop %v1138
        %v1140 = vmul.f32 %v1024, 1.442695
        %v1141 = vpow.pop %v1140
        %v1142 = vmul.f32 %v1025, 1.442695
        %v1143 = vpow.pop %v1142
        %v1144 = vmul.f32 %v1026, 1.442695
        %v1145 = vpow.pop %v1144
        %v1146 = vmul.f32 %v1027, 1.442695
        %v1147 = vpow.pop %v1146
        %v1148 = vmul.f32 %v1028, 1.442695
        %v1149 = vpow.pop %v1148
        %v1150 = vmul.f32 %v1029, 1.442695
        %v1151 = vpow.pop %v1150
        %v1152 = vmul.f32 %v1030, 1.442695
        %v1153 = vpow.pop %v1152
        %v1154 = vmul.f32 %v1031, 1.442695
        %v1155 = vpow.pop %v1154
        %v1156 = vmul.f32 %v1032, 1.442695
        %v1157 = vpow.pop %v1156
        %v1158 = vmul.f32 %v1033, 1.442695
        %v1159 = vpow.pop %v1158
        %v1160 = vmul.f32 %v1034, 1.442695
        %v1161 = vpow.pop %v1160
        %v1162 = vmul.f32 %v1035, 1.442695
        %v1163 = vpow.pop %v1162
        %v1164 = vmul.f32 %v1036, 1.442695
        %v1165 = vpow.pop %v1164
        %v1166 = vmul.f32 %v1037, 1.442695
        %v1167 = vpow.pop %v1166
        %v1168 = vmul.f32 %v1038, 1.442695
        %v1169 = vpow.pop %v1168
        %v1170 = vmul.f32 %v1039, 1.442695
        %v1171 = vpow.pop %v1170
        %v1172 = vmul.f32 %v1040, 1.442695
        %v1173 = vpow.pop %v1172
        %v1174 = vmul.f32 %v1041, 1.442695
        %v1175 = vpow.pop %v1174
        %v1176 = vmul.f32 %v1042, 1.442695
        %v1177 = vpow.pop %v1176
        %v1178 = vmul.f32 %v1043, 1.442695
        %v1179 = vpow.pop %v1178
        %v1180 = vmul.f32 %v1044, 1.442695
        %v1181 = vpow.pop %v1180
        %v1182 = vmul.f32 %v1045, 1.442695
        %v1183 = vpow.pop %v1182
        %v1184 = vmul.f32 %v1046, 1.442695
        %v1185 = vpow.pop %v1184
        %v1186 = vmul.f32 %v1047, 1.442695
        %v1187 = vpow.pop %v1186
        %v1188 = vmul.f32 %v1048, 1.442695
        %v1189 = vpow.pop %v1188
        %v1190 = vmul.f32 %v1049, 1.442695
        %v1191 = vpow.pop %v1190
        %v1192 = vmul.f32 %v1050, 1.442695
        %v1193 = vpow.pop %v1192
        %v1194 = vmul.f32 %v1051, 1.442695
        %v1195 = vpow.pop %v1194
        %v1196 = vmul.f32 %v1052, 1.442695
        %v1197 = vpow.pop %v1196
        %v1198 = vmul.f32 %v1053, 1.442695
        %v1199 = vpow.pop %v1198
        %v1200 = vmul.f32 %v1054, 1.442695
        %v1201 = vpow.pop %v1200
        %v1202 = vmul.f32 %v1055, 1.442695
        %v1203 = vpow.pop %v1202
        %v1204 = vmul.f32 %v1056, 1.442695
        %v1205 = vpow.pop %v1204
        %v1206 = vmul.f32 %v1057, 1.442695
        %v1207 = vpow.pop %v1206
        %v1208 = vmul.f32 %v1058, 1.442695
        %v1209 = vpow.pop %v1208
        %v1210 = vmul.f32 %v1059, 1.442695
        %v1211 = vpow.pop %v1210
        %v1212 = vmul.f32 %v1060, 1.442695
        %v1213 = vpow.pop %v1212
        %v1214 = vmul.f32 %v1061, 1.442695
        %v1215 = vpow.pop %v1214
        %v1216 = vmul.f32 %v1062, 1.442695
        %v1217 = vpow.pop %v1216
        %v1218 = vmul.f32 %v1063, 1.442695
        %v1219 = vpow.pop %v1218
        %v1220 = vmul.f32 %v1064, 1.442695
        %v1221 = vpow.pop %v1220
        %v1222 = vmul.f32 %v1065, 1.442695
        %v1223 = vpow.pop %v1222
        %v1224 = vmul.f32 %v1066, 1.442695
        %v1225 = vpow.pop %v1224
        %v1226 = vmul.f32 %v1067, 1.442695
        %v1227 = vpow.pop %v1226
        %1229 = vset.pattern.permute.xlu0 0
        %1230 = vperm.xlu0 %1229, %v796
        %v1231 = vpop.permute.xlu0 %1230
        %1234 = vset.pattern.permute.xlu0 0
        %1235 = vperm.xlu0 %1234, %v797
        %v1236 = vpop.permute.xlu0 %1235
        %1239 = vset.pattern.permute.xlu0 0
        %1240 = vperm.xlu0 %1239, %v798
        %v1241 = vpop.permute.xlu0 %1240
        %1244 = vset.pattern.permute.xlu0 0
        %1245 = vperm.xlu0 %1244, %v799
        %v1246 = vpop.permute.xlu0 %1245
        %1249 = vset.pattern.permute.xlu0 0
        %1250 = vperm.xlu0 %1249, %v800
        %v1251 = vpop.permute.xlu0 %1250
        %1254 = vset.pattern.permute.xlu0 0
        %1255 = vperm.xlu0 %1254, %v801
        %v1256 = vpop.permute.xlu0 %1255
        %1259 = vset.pattern.permute.xlu0 0
        %1260 = vperm.xlu0 %1259, %v802
        %v1261 = vpop.permute.xlu0 %1260
        %1264 = vset.pattern.permute.xlu0 0
        %1265 = vperm.xlu0 %1264, %v803
        %v1266 = vpop.permute.xlu0 %1265
        %1269 = vset.pattern.permute.xlu0 0
        %1270 = vperm.xlu0 %1269, %v804
        %v1271 = vpop.permute.xlu0 %1270
        %1274 = vset.pattern.permute.xlu0 0
        %1275 = vperm.xlu0 %1274, %v805
        %v1276 = vpop.permute.xlu0 %1275
        %1279 = vset.pattern.permute.xlu0 0
        %1280 = vperm.xlu0 %1279, %v806
        %v1281 = vpop.permute.xlu0 %1280
        %1284 = vset.pattern.permute.xlu0 0
        %1285 = vperm.xlu0 %1284, %v807
        %v1286 = vpop.permute.xlu0 %1285
        %1289 = vset.pattern.permute.xlu0 0
        %1290 = vperm.xlu0 %1289, %v808
        %v1291 = vpop.permute.xlu0 %1290
        %1294 = vset.pattern.permute.xlu0 0
        %1295 = vperm.xlu0 %1294, %v809
        %v1296 = vpop.permute.xlu0 %1295
        %1299 = vset.pattern.permute.xlu0 0
        %1300 = vperm.xlu0 %1299, %v810
        %v1301 = vpop.permute.xlu0 %1300
        %1304 = vset.pattern.permute.xlu0 0
        %1305 = vperm.xlu0 %1304, %v811
        %v1306 = vpop.permute.xlu0 %1305
        %v1308 = vsub.f32 %v396, %v1231
        %v1309 = vsub.f32 %v397, %v1231
        %v1310 = vsub.f32 %v398, %v1231
        %v1311 = vsub.f32 %v399, %v1231
        %v1312 = vsub.f32 %v400, %v1231
        %v1313 = vsub.f32 %v401, %v1236
        %v1314 = vsub.f32 %v402, %v1236
        %v1315 = vsub.f32 %v403, %v1236
        %v1316 = vsub.f32 %v404, %v1236
        %v1317 = vsub.f32 %v405, %v1236
        %v1318 = vsub.f32 %v406, %v1241
        %v1319 = vsub.f32 %v407, %v1241
        %v1320 = vsub.f32 %v408, %v1241
        %v1321 = vsub.f32 %v409, %v1241
        %v1322 = vsub.f32 %v410, %v1241
        %v1323 = vsub.f32 %v411, %v1246
        %v1324 = vsub.f32 %v412, %v1246
        %v1325 = vsub.f32 %v413, %v1246
        %v1326 = vsub.f32 %v414, %v1246
        %v1327 = vsub.f32 %v415, %v1246
        %v1328 = vsub.f32 %v416, %v1251
        %v1329 = vsub.f32 %v417, %v1251
        %v1330 = vsub.f32 %v418, %v1251
        %v1331 = vsub.f32 %v419, %v1251
        %v1332 = vsub.f32 %v420, %v1251
        %v1333 = vsub.f32 %v421, %v1256
        %v1334 = vsub.f32 %v422, %v1256
        %v1335 = vsub.f32 %v423, %v1256
        %v1336 = vsub.f32 %v424, %v1256
        %v1337 = vsub.f32 %v425, %v1256
        %v1338 = vsub.f32 %v426, %v1261
        %v1339 = vsub.f32 %v427, %v1261
        %v1340 = vsub.f32 %v428, %v1261
        %v1341 = vsub.f32 %v429, %v1261
        %v1342 = vsub.f32 %v430, %v1261
        %v1343 = vsub.f32 %v431, %v1266
        %v1344 = vsub.f32 %v432, %v1266
        %v1345 = vsub.f32 %v433, %v1266
        %v1346 = vsub.f32 %v434, %v1266
        %v1347 = vsub.f32 %v435, %v1266
        %v1348 = vsub.f32 %v436, %v1271
        %v1349 = vsub.f32 %v437, %v1271
        %v1350 = vsub.f32 %v438, %v1271
        %v1351 = vsub.f32 %v439, %v1271
        %v1352 = vsub.f32 %v440, %v1271
        %v1353 = vsub.f32 %v441, %v1276
        %v1354 = vsub.f32 %v442, %v1276
        %v1355 = vsub.f32 %v443, %v1276
        %v1356 = vsub.f32 %v444, %v1276
        %v1357 = vsub.f32 %v445, %v1276
        %v1358 = vsub.f32 %v446, %v1281
        %v1359 = vsub.f32 %v447, %v1281
        %v1360 = vsub.f32 %v448, %v1281
        %v1361 = vsub.f32 %v449, %v1281
        %v1362 = vsub.f32 %v450, %v1281
        %v1363 = vsub.f32 %v451, %v1286
        %v1364 = vsub.f32 %v452, %v1286
        %v1365 = vsub.f32 %v453, %v1286
        %v1366 = vsub.f32 %v454, %v1286
        %v1367 = vsub.f32 %v455, %v1286
        %v1368 = vsub.f32 %v456, %v1291
        %v1369 = vsub.f32 %v457, %v1291
        %v1370 = vsub.f32 %v458, %v1291
        %v1371 = vsub.f32 %v459, %v1291
        %v1372 = vsub.f32 %v460, %v1291
        %v1373 = vsub.f32 %v461, %v1296
        %v1374 = vsub.f32 %v462, %v1296
        %v1375 = vsub.f32 %v463, %v1296
        %v1376 = vsub.f32 %v464, %v1296
        %v1377 = vsub.f32 %v465, %v1296
        %v1378 = vsub.f32 %v466, %v1301
        %v1379 = vsub.f32 %v467, %v1301
        %v1380 = vsub.f32 %v468, %v1301
        %v1381 = vsub.f32 %v469, %v1301
        %v1382 = vsub.f32 %v470, %v1301
        %v1383 = vsub.f32 %v471, %v1306
        %v1384 = vsub.f32 %v472, %v1306
        %v1385 = vsub.f32 %v473, %v1306
        %v1386 = vsub.f32 %v474, %v1306
        %v1387 = vsub.f32 %v475, %v1306
        %v1388 = vmul.f32 %v1308, 1.442695
        %v1389 = vpow.pop %v1388
        %v1390 = vmul.f32 %v1309, 1.442695
        %v1391 = vpow.pop %v1390
        %v1392 = vmul.f32 %v1310, 1.442695
        %v1393 = vpow.pop %v1392
        %v1394 = vmul.f32 %v1311, 1.442695
        %v1395 = vpow.pop %v1394
        %v1396 = vmul.f32 %v1312, 1.442695
        %v1397 = vpow.pop %v1396
        %v1398 = vmul.f32 %v1313, 1.442695
        %v1399 = vpow.pop %v1398
        %v1400 = vmul.f32 %v1314, 1.442695
        %v1401 = vpow.pop %v1400
        %v1402 = vmul.f32 %v1315, 1.442695
        %v1403 = vpow.pop %v1402
        %v1404 = vmul.f32 %v1316, 1.442695
        %v1405 = vpow.pop %v1404
        %v1406 = vmul.f32 %v1317, 1.442695
        %v1407 = vpow.pop %v1406
        %v1408 = vmul.f32 %v1318, 1.442695
        %v1409 = vpow.pop %v1408
        %v1410 = vmul.f32 %v1319, 1.442695
        %v1411 = vpow.pop %v1410
        %v1412 = vmul.f32 %v1320, 1.442695
        %v1413 = vpow.pop %v1412
        %v1414 = vmul.f32 %v1321, 1.442695
        %v1415 = vpow.pop %v1414
        %v1416 = vmul.f32 %v1322, 1.442695
        %v1417 = vpow.pop %v1416
        %v1418 = vmul.f32 %v1323, 1.442695
        %v1419 = vpow.pop %v1418
        %v1420 = vmul.f32 %v1324, 1.442695
        %v1421 = vpow.pop %v1420
        %v1422 = vmul.f32 %v1325, 1.442695
        %v1423 = vpow.pop %v1422
        %v1424 = vmul.f32 %v1326, 1.442695
        %v1425 = vpow.pop %v1424
        %v1426 = vmul.f32 %v1327, 1.442695
        %v1427 = vpow.pop %v1426
        %v1428 = vmul.f32 %v1328, 1.442695
        %v1429 = vpow.pop %v1428
        %v1430 = vmul.f32 %v1329, 1.442695
        %v1431 = vpow.pop %v1430
        %v1432 = vmul.f32 %v1330, 1.442695
        %v1433 = vpow.pop %v1432
        %v1434 = vmul.f32 %v1331, 1.442695
        %v1435 = vpow.pop %v1434
        %v1436 = vmul.f32 %v1332, 1.442695
        %v1437 = vpow.pop %v1436
        %v1438 = vmul.f32 %v1333, 1.442695
        %v1439 = vpow.pop %v1438
        %v1440 = vmul.f32 %v1334, 1.442695
        %v1441 = vpow.pop %v1440
        %v1442 = vmul.f32 %v1335, 1.442695
        %v1443 = vpow.pop %v1442
        %v1444 = vmul.f32 %v1336, 1.442695
        %v1445 = vpow.pop %v1444
        %v1446 = vmul.f32 %v1337, 1.442695
        %v1447 = vpow.pop %v1446
        %v1448 = vmul.f32 %v1338, 1.442695
        %v1449 = vpow.pop %v1448
        %v1450 = vmul.f32 %v1339, 1.442695
        %v1451 = vpow.pop %v1450
        %v1452 = vmul.f32 %v1340, 1.442695
        %v1453 = vpow.pop %v1452
        %v1454 = vmul.f32 %v1341, 1.442695
        %v1455 = vpow.pop %v1454
        %v1456 = vmul.f32 %v1342, 1.442695
        %v1457 = vpow.pop %v1456
        %v1458 = vmul.f32 %v1343, 1.442695
        %v1459 = vpow.pop %v1458
        %v1460 = vmul.f32 %v1344, 1.442695
        %v1461 = vpow.pop %v1460
        %v1462 = vmul.f32 %v1345, 1.442695
        %v1463 = vpow.pop %v1462
        %v1464 = vmul.f32 %v1346, 1.442695
        %v1465 = vpow.pop %v1464
        %v1466 = vmul.f32 %v1347, 1.442695
        %v1467 = vpow.pop %v1466
        %v1468 = vmul.f32 %v1348, 1.442695
        %v1469 = vpow.pop %v1468
        %v1470 = vmul.f32 %v1349, 1.442695
        %v1471 = vpow.pop %v1470
        %v1472 = vmul.f32 %v1350, 1.442695
        %v1473 = vpow.pop %v1472
        %v1474 = vmul.f32 %v1351, 1.442695
        %v1475 = vpow.pop %v1474
        %v1476 = vmul.f32 %v1352, 1.442695
        %v1477 = vpow.pop %v1476
        %v1478 = vmul.f32 %v1353, 1.442695
        %v1479 = vpow.pop %v1478
        %v1480 = vmul.f32 %v1354, 1.442695
        %v1481 = vpow.pop %v1480
        %v1482 = vmul.f32 %v1355, 1.442695
        %v1483 = vpow.pop %v1482
        %v1484 = vmul.f32 %v1356, 1.442695
        %v1485 = vpow.pop %v1484
        %v1486 = vmul.f32 %v1357, 1.442695
        %v1487 = vpow.pop %v1486
        %v1488 = vmul.f32 %v1358, 1.442695
        %v1489 = vpow.pop %v1488
        %v1490 = vmul.f32 %v1359, 1.442695
        %v1491 = vpow.pop %v1490
        %v1492 = vmul.f32 %v1360, 1.442695
        %v1493 = vpow.pop %v1492
        %v1494 = vmul.f32 %v1361, 1.442695
        %v1495 = vpow.pop %v1494
        %v1496 = vmul.f32 %v1362, 1.442695
        %v1497 = vpow.pop %v1496
        %v1498 = vmul.f32 %v1363, 1.442695
        %v1499 = vpow.pop %v1498
        %v1500 = vmul.f32 %v1364, 1.442695
        %v1501 = vpow.pop %v1500
        %v1502 = vmul.f32 %v1365, 1.442695
        %v1503 = vpow.pop %v1502
        %v1504 = vmul.f32 %v1366, 1.442695
        %v1505 = vpow.pop %v1504
        %v1506 = vmul.f32 %v1367, 1.442695
        %v1507 = vpow.pop %v1506
        %v1508 = vmul.f32 %v1368, 1.442695
        %v1509 = vpow.pop %v1508
        %v1510 = vmul.f32 %v1369, 1.442695
        %v1511 = vpow.pop %v1510
        %v1512 = vmul.f32 %v1370, 1.442695
        %v1513 = vpow.pop %v1512
        %v1514 = vmul.f32 %v1371, 1.442695
        %v1515 = vpow.pop %v1514
        %v1516 = vmul.f32 %v1372, 1.442695
        %v1517 = vpow.pop %v1516
        %v1518 = vmul.f32 %v1373, 1.442695
        %v1519 = vpow.pop %v1518
        %v1520 = vmul.f32 %v1374, 1.442695
        %v1521 = vpow.pop %v1520
        %v1522 = vmul.f32 %v1375, 1.442695
        %v1523 = vpow.pop %v1522
        %v1524 = vmul.f32 %v1376, 1.442695
        %v1525 = vpow.pop %v1524
        %v1526 = vmul.f32 %v1377, 1.442695
        %v1527 = vpow.pop %v1526
        %v1528 = vmul.f32 %v1378, 1.442695
        %v1529 = vpow.pop %v1528
        %v1530 = vmul.f32 %v1379, 1.442695
        %v1531 = vpow.pop %v1530
        %v1532 = vmul.f32 %v1380, 1.442695
        %v1533 = vpow.pop %v1532
        %v1534 = vmul.f32 %v1381, 1.442695
        %v1535 = vpow.pop %v1534
        %v1536 = vmul.f32 %v1382, 1.442695
        %v1537 = vpow.pop %v1536
        %v1538 = vmul.f32 %v1383, 1.442695
        %v1539 = vpow.pop %v1538
        %v1540 = vmul.f32 %v1384, 1.442695
        %v1541 = vpow.pop %v1540
        %v1542 = vmul.f32 %v1385, 1.442695
        %v1543 = vpow.pop %v1542
        %v1544 = vmul.f32 %v1386, 1.442695
        %v1545 = vpow.pop %v1544
        %v1546 = vmul.f32 %v1387, 1.442695
        %v1547 = vpow.pop %v1546
        %v1548 = vld [vmem:[#allocation4] sm:$0xff]
        %v1549 = vld [vmem:[#allocation4 + $0x8] sm:$0xff]
        %v1550 = vld [vmem:[#allocation4 + $0x10] sm:$0xff]
        %v1551 = vld [vmem:[#allocation4 + $0x18] sm:$0xff]
        %v1552 = vld [vmem:[#allocation4 + $0x20] sm:$0xff]
        %v1553 = vld [vmem:[#allocation4 + $0x28] sm:$0xff]
        %v1554 = vld [vmem:[#allocation4 + $0x30] sm:$0xff]
        %v1555 = vld [vmem:[#allocation4 + $0x38] sm:$0xff]
        %v1556 = vld [vmem:[#allocation4 + $0x40] sm:$0xff]
        %v1557 = vld [vmem:[#allocation4 + $0x48] sm:$0xff]
        %v1558 = vld [vmem:[#allocation4 + $0x50] sm:$0xff]
        %v1559 = vld [vmem:[#allocation4 + $0x58] sm:$0xff]
        %v1560 = vld [vmem:[#allocation4 + $0x60] sm:$0xff]
        %v1561 = vld [vmem:[#allocation4 + $0x68] sm:$0xff]
        %v1562 = vld [vmem:[#allocation4 + $0x70] sm:$0xff]
        %v1563 = vld [vmem:[#allocation4 + $0x78] sm:$0xff]
        %v1564 = vmul.f32 %v829, %v1548
        %v1565 = vmul.f32 %v831, %v1549
        %v1566 = vmul.f32 %v833, %v1550
        %v1567 = vmul.f32 %v835, %v1551
        %v1568 = vmul.f32 %v837, %v1552
        %v1569 = vmul.f32 %v839, %v1553
        %v1570 = vmul.f32 %v841, %v1554
        %v1571 = vmul.f32 %v843, %v1555
        %v1572 = vmul.f32 %v845, %v1556
        %v1573 = vmul.f32 %v847, %v1557
        %v1574 = vmul.f32 %v849, %v1558
        %v1575 = vmul.f32 %v851, %v1559
        %v1576 = vmul.f32 %v853, %v1560
        %v1577 = vmul.f32 %v855, %v1561
        %v1578 = vmul.f32 %v857, %v1562
        %v1579 = vmul.f32 %v859, %v1563
        %v1580 = vadd.f32 %v1069, %v1071
        %v1581 = vadd.f32 %v1580, %v1073
        %v1582 = vadd.f32 %v1581, %v1075
        %v1583 = vadd.f32 %v1582, %v1077
        %1584 = vadd.xlane.f32.xlu0 %v1583
        %v1585 = vpop.xlane.xlu0 %1584
        %v1586 = vadd.f32 %v1079, %v1081
        %v1587 = vadd.f32 %v1586, %v1083
        %v1588 = vadd.f32 %v1587, %v1085
        %v1589 = vadd.f32 %v1588, %v1087
        %1590 = vadd.xlane.f32.xlu0 %v1589
        %v1591 = vpop.xlane.xlu0 %1590
        %v1592 = vadd.f32 %v1089, %v1091
        %v1593 = vadd.f32 %v1592, %v1093
        %v1594 = vadd.f32 %v1593, %v1095
        %v1595 = vadd.f32 %v1594, %v1097
        %1596 = vadd.xlane.f32.xlu0 %v1595
        %v1597 = vpop.xlane.xlu0 %1596
        %v1598 = vadd.f32 %v1099, %v1101
        %v1599 = vadd.f32 %v1598, %v1103
        %v1600 = vadd.f32 %v1599, %v1105
        %v1601 = vadd.f32 %v1600, %v1107
        %1602 = vadd.xlane.f32.xlu0 %v1601
        %v1603 = vpop.xlane.xlu0 %1602
        %v1604 = vadd.f32 %v1109, %v1111
        %v1605 = vadd.f32 %v1604, %v1113
        %v1606 = vadd.f32 %v1605, %v1115
        %v1607 = vadd.f32 %v1606, %v1117
        %1608 = vadd.xlane.f32.xlu0 %v1607
        %v1609 = vpop.xlane.xlu0 %1608
        %v1610 = vadd.f32 %v1119, %v1121
        %v1611 = vadd.f32 %v1610, %v1123
        %v1612 = vadd.f32 %v1611, %v1125
        %v1613 = vadd.f32 %v1612, %v1127
        %1614 = vadd.xlane.f32.xlu0 %v1613
        %v1615 = vpop.xlane.xlu0 %1614
        %v1616 = vadd.f32 %v1129, %v1131
        %v1617 = vadd.f32 %v1616, %v1133
        %v1618 = vadd.f32 %v1617, %v1135
        %v1619 = vadd.f32 %v1618, %v1137
        %1620 = vadd.xlane.f32.xlu0 %v1619
        %v1621 = vpop.xlane.xlu0 %1620
        %v1622 = vadd.f32 %v1139, %v1141
        %v1623 = vadd.f32 %v1622, %v1143
        %v1624 = vadd.f32 %v1623, %v1145
        %v1625 = vadd.f32 %v1624, %v1147
        %1626 = vadd.xlane.f32.xlu0 %v1625
        %v1627 = vpop.xlane.xlu0 %1626
        %v1628 = vadd.f32 %v1149, %v1151
        %v1629 = vadd.f32 %v1628, %v1153
        %v1630 = vadd.f32 %v1629, %v1155
        %v1631 = vadd.f32 %v1630, %v1157
        %1632 = vadd.xlane.f32.xlu0 %v1631
        %v1633 = vpop.xlane.xlu0 %1632
        %v1634 = vadd.f32 %v1159, %v1161
        %v1635 = vadd.f32 %v1634, %v1163
        %v1636 = vadd.f32 %v1635, %v1165
        %v1637 = vadd.f32 %v1636, %v1167
        %1638 = vadd.xlane.f32.xlu0 %v1637
        %v1639 = vpop.xlane.xlu0 %1638
        %v1640 = vadd.f32 %v1169, %v1171
        %v1641 = vadd.f32 %v1640, %v1173
        %v1642 = vadd.f32 %v1641, %v1175
        %v1643 = vadd.f32 %v1642, %v1177
        %1644 = vadd.xlane.f32.xlu0 %v1643
        %v1645 = vpop.xlane.xlu0 %1644
        %v1646 = vadd.f32 %v1179, %v1181
        %v1647 = vadd.f32 %v1646, %v1183
        %v1648 = vadd.f32 %v1647, %v1185
        %v1649 = vadd.f32 %v1648, %v1187
        %1650 = vadd.xlane.f32.xlu0 %v1649
        %v1651 = vpop.xlane.xlu0 %1650
        %v1652 = vadd.f32 %v1189, %v1191
        %v1653 = vadd.f32 %v1652, %v1193
        %v1654 = vadd.f32 %v1653, %v1195
        %v1655 = vadd.f32 %v1654, %v1197
        %1656 = vadd.xlane.f32.xlu0 %v1655
        %v1657 = vpop.xlane.xlu0 %1656
        %v1658 = vadd.f32 %v1199, %v1201
        %v1659 = vadd.f32 %v1658, %v1203
        %v1660 = vadd.f32 %v1659, %v1205
        %v1661 = vadd.f32 %v1660, %v1207
        %1662 = vadd.xlane.f32.xlu0 %v1661
        %v1663 = vpop.xlane.xlu0 %1662
        %v1664 = vadd.f32 %v1209, %v1211
        %v1665 = vadd.f32 %v1664, %v1213
        %v1666 = vadd.f32 %v1665, %v1215
        %v1667 = vadd.f32 %v1666, %v1217
        %1668 = vadd.xlane.f32.xlu0 %v1667
        %v1669 = vpop.xlane.xlu0 %1668
        %v1670 = vadd.f32 %v1219, %v1221
        %v1671 = vadd.f32 %v1670, %v1223
        %v1672 = vadd.f32 %v1671, %v1225
        %v1673 = vadd.f32 %v1672, %v1227
        %1674 = vadd.xlane.f32.xlu0 %v1673
        %v1675 = vpop.xlane.xlu0 %1674
        %v1676 = vadd.f32 %v1564, %v1585
        %v1677 = vadd.f32 %v1565, %v1591
        %v1678 = vadd.f32 %v1566, %v1597
        %v1679 = vadd.f32 %v1567, %v1603
        %v1680 = vadd.f32 %v1568, %v1609
        %v1681 = vadd.f32 %v1569, %v1615
        %v1682 = vadd.f32 %v1570, %v1621
        %v1683 = vadd.f32 %v1571, %v1627
        %v1684 = vadd.f32 %v1572, %v1633
        %v1685 = vadd.f32 %v1573, %v1639
        %v1686 = vadd.f32 %v1574, %v1645
        %v1687 = vadd.f32 %v1575, %v1651
        %v1688 = vadd.f32 %v1576, %v1657
        %v1689 = vadd.f32 %v1577, %v1663
        %v1690 = vadd.f32 %v1578, %v1669
        %v1691 = vadd.f32 %v1579, %v1675
        %vm1692 = vcmask 7168
        %1693 = vst.msk [vmem:[#allocation4] sm:$0xff] %vm1692, %v1676
        %1694 = vst.msk [vmem:[#allocation4 + $0x8] sm:$0xff] %vm1692, %v1677
        %1695 = vst.msk [vmem:[#allocation4 + $0x10] sm:$0xff] %vm1692, %v1678
        %1696 = vst.msk [vmem:[#allocation4 + $0x18] sm:$0xff] %vm1692, %v1679
        %1697 = vst.msk [vmem:[#allocation4 + $0x20] sm:$0xff] %vm1692, %v1680
        %1698 = vst.msk [vmem:[#allocation4 + $0x28] sm:$0xff] %vm1692, %v1681
        %1699 = vst.msk [vmem:[#allocation4 + $0x30] sm:$0xff] %vm1692, %v1682
        %1700 = vst.msk [vmem:[#allocation4 + $0x38] sm:$0xff] %vm1692, %v1683
        %1701 = vst.msk [vmem:[#allocation4 + $0x40] sm:$0xff] %vm1692, %v1684
        %1702 = vst.msk [vmem:[#allocation4 + $0x48] sm:$0xff] %vm1692, %v1685
        %1703 = vst.msk [vmem:[#allocation4 + $0x50] sm:$0xff] %vm1692, %v1686
        %1704 = vst.msk [vmem:[#allocation4 + $0x58] sm:$0xff] %vm1692, %v1687
        %1705 = vst.msk [vmem:[#allocation4 + $0x60] sm:$0xff] %vm1692, %v1688
        %1706 = vst.msk [vmem:[#allocation4 + $0x68] sm:$0xff] %vm1692, %v1689
        %1707 = vst.msk [vmem:[#allocation4 + $0x70] sm:$0xff] %vm1692, %v1690
        %1708 = vst.msk [vmem:[#allocation4 + $0x78] sm:$0xff] %vm1692, %v1691
        %v1709 = vld [vmem:[#allocation5] sm:$0xff]
        %v1710 = vld [vmem:[#allocation5 + $0x8] sm:$0xff]
        %v1711 = vld [vmem:[#allocation5 + $0x10] sm:$0xff]
        %v1712 = vld [vmem:[#allocation5 + $0x18] sm:$0xff]
        %v1713 = vld [vmem:[#allocation5 + $0x20] sm:$0xff]
        %v1714 = vld [vmem:[#allocation5 + $0x28] sm:$0xff]
        %v1715 = vld [vmem:[#allocation5 + $0x30] sm:$0xff]
        %v1716 = vld [vmem:[#allocation5 + $0x38] sm:$0xff]
        %v1717 = vld [vmem:[#allocation5 + $0x40] sm:$0xff]
        %v1718 = vld [vmem:[#allocation5 + $0x48] sm:$0xff]
        %v1719 = vld [vmem:[#allocation5 + $0x50] sm:$0xff]
        %v1720 = vld [vmem:[#allocation5 + $0x58] sm:$0xff]
        %v1721 = vld [vmem:[#allocation5 + $0x60] sm:$0xff]
        %v1722 = vld [vmem:[#allocation5 + $0x68] sm:$0xff]
        %v1723 = vld [vmem:[#allocation5 + $0x70] sm:$0xff]
        %v1724 = vld [vmem:[#allocation5 + $0x78] sm:$0xff]
        %v1725 = vmul.f32 %v877, %v1709
        %v1726 = vmul.f32 %v879, %v1710
        %v1727 = vmul.f32 %v881, %v1711
        %v1728 = vmul.f32 %v883, %v1712
        %v1729 = vmul.f32 %v885, %v1713
        %v1730 = vmul.f32 %v887, %v1714
        %v1731 = vmul.f32 %v889, %v1715
        %v1732 = vmul.f32 %v891, %v1716
        %v1733 = vmul.f32 %v893, %v1717
        %v1734 = vmul.f32 %v895, %v1718
        %v1735 = vmul.f32 %v897, %v1719
        %v1736 = vmul.f32 %v899, %v1720
        %v1737 = vmul.f32 %v901, %v1721
        %v1738 = vmul.f32 %v903, %v1722
        %v1739 = vmul.f32 %v905, %v1723
        %v1740 = vmul.f32 %v907, %v1724
        %v1741 = vadd.f32 %v1389, %v1391
        %v1742 = vadd.f32 %v1741, %v1393
        %v1743 = vadd.f32 %v1742, %v1395
        %v1744 = vadd.f32 %v1743, %v1397
        %1745 = vadd.xlane.f32.xlu0 %v1744
        %v1746 = vpop.xlane.xlu0 %1745
        %v1747 = vadd.f32 %v1399, %v1401
        %v1748 = vadd.f32 %v1747, %v1403
        %v1749 = vadd.f32 %v1748, %v1405
        %v1750 = vadd.f32 %v1749, %v1407
        %1751 = vadd.xlane.f32.xlu0 %v1750
        %v1752 = vpop.xlane.xlu0 %1751
        %v1753 = vadd.f32 %v1409, %v1411
        %v1754 = vadd.f32 %v1753, %v1413
        %v1755 = vadd.f32 %v1754, %v1415
        %v1756 = vadd.f32 %v1755, %v1417
        %1757 = vadd.xlane.f32.xlu0 %v1756
        %v1758 = vpop.xlane.xlu0 %1757
        %v1759 = vadd.f32 %v1419, %v1421
        %v1760 = vadd.f32 %v1759, %v1423
        %v1761 = vadd.f32 %v1760, %v1425
        %v1762 = vadd.f32 %v1761, %v1427
        %1763 = vadd.xlane.f32.xlu0 %v1762
        %v1764 = vpop.xlane.xlu0 %1763
        %v1765 = vadd.f32 %v1429, %v1431
        %v1766 = vadd.f32 %v1765, %v1433
        %v1767 = vadd.f32 %v1766, %v1435
        %v1768 = vadd.f32 %v1767, %v1437
        %1769 = vadd.xlane.f32.xlu0 %v1768
        %v1770 = vpop.xlane.xlu0 %1769
        %v1771 = vadd.f32 %v1439, %v1441
        %v1772 = vadd.f32 %v1771, %v1443
        %v1773 = vadd.f32 %v1772, %v1445
        %v1774 = vadd.f32 %v1773, %v1447
        %1775 = vadd.xlane.f32.xlu0 %v1774
        %v1776 = vpop.xlane.xlu0 %1775
        %v1777 = vadd.f32 %v1449, %v1451
        %v1778 = vadd.f32 %v1777, %v1453
        %v1779 = vadd.f32 %v1778, %v1455
        %v1780 = vadd.f32 %v1779, %v1457
        %1781 = vadd.xlane.f32.xlu0 %v1780
        %v1782 = vpop.xlane.xlu0 %1781
        %v1783 = vadd.f32 %v1459, %v1461
        %v1784 = vadd.f32 %v1783, %v1463
        %v1785 = vadd.f32 %v1784, %v1465
        %v1786 = vadd.f32 %v1785, %v1467
        %1787 = vadd.xlane.f32.xlu0 %v1786
        %v1788 = vpop.xlane.xlu0 %1787
        %v1789 = vadd.f32 %v1469, %v1471
        %v1790 = vadd.f32 %v1789, %v1473
        %v1791 = vadd.f32 %v1790, %v1475
        %v1792 = vadd.f32 %v1791, %v1477
        %1793 = vadd.xlane.f32.xlu0 %v1792
        %v1794 = vpop.xlane.xlu0 %1793
        %v1795 = vadd.f32 %v1479, %v1481
        %v1796 = vadd.f32 %v1795, %v1483
        %v1797 = vadd.f32 %v1796, %v1485
        %v1798 = vadd.f32 %v1797, %v1487
        %1799 = vadd.xlane.f32.xlu0 %v1798
        %v1800 = vpop.xlane.xlu0 %1799
        %v1801 = vadd.f32 %v1489, %v1491
        %v1802 = vadd.f32 %v1801, %v1493
        %v1803 = vadd.f32 %v1802, %v1495
        %v1804 = vadd.f32 %v1803, %v1497
        %1805 = vadd.xlane.f32.xlu0 %v1804
        %v1806 = vpop.xlane.xlu0 %1805
        %v1807 = vadd.f32 %v1499, %v1501
        %v1808 = vadd.f32 %v1807, %v1503
        %v1809 = vadd.f32 %v1808, %v1505
        %v1810 = vadd.f32 %v1809, %v1507
        %1811 = vadd.xlane.f32.xlu0 %v1810
        %v1812 = vpop.xlane.xlu0 %1811
        %v1813 = vadd.f32 %v1509, %v1511
        %v1814 = vadd.f32 %v1813, %v1513
        %v1815 = vadd.f32 %v1814, %v1515
        %v1816 = vadd.f32 %v1815, %v1517
        %1817 = vadd.xlane.f32.xlu0 %v1816
        %v1818 = vpop.xlane.xlu0 %1817
        %v1819 = vadd.f32 %v1519, %v1521
        %v1820 = vadd.f32 %v1819, %v1523
        %v1821 = vadd.f32 %v1820, %v1525
        %v1822 = vadd.f32 %v1821, %v1527
        %1823 = vadd.xlane.f32.xlu0 %v1822
        %v1824 = vpop.xlane.xlu0 %1823
        %v1825 = vadd.f32 %v1529, %v1531
        %v1826 = vadd.f32 %v1825, %v1533
        %v1827 = vadd.f32 %v1826, %v1535
        %v1828 = vadd.f32 %v1827, %v1537
        %1829 = vadd.xlane.f32.xlu0 %v1828
        %v1830 = vpop.xlane.xlu0 %1829
        %v1831 = vadd.f32 %v1539, %v1541
        %v1832 = vadd.f32 %v1831, %v1543
        %v1833 = vadd.f32 %v1832, %v1545
        %v1834 = vadd.f32 %v1833, %v1547
        %1835 = vadd.xlane.f32.xlu0 %v1834
        %v1836 = vpop.xlane.xlu0 %1835
        %v1837 = vadd.f32 %v1725, %v1746
        %v1838 = vadd.f32 %v1726, %v1752
        %v1839 = vadd.f32 %v1727, %v1758
        %v1840 = vadd.f32 %v1728, %v1764
        %v1841 = vadd.f32 %v1729, %v1770
        %v1842 = vadd.f32 %v1730, %v1776
        %v1843 = vadd.f32 %v1731, %v1782
        %v1844 = vadd.f32 %v1732, %v1788
        %v1845 = vadd.f32 %v1733, %v1794
        %v1846 = vadd.f32 %v1734, %v1800
        %v1847 = vadd.f32 %v1735, %v1806
        %v1848 = vadd.f32 %v1736, %v1812
        %v1849 = vadd.f32 %v1737, %v1818
        %v1850 = vadd.f32 %v1738, %v1824
        %v1851 = vadd.f32 %v1739, %v1830
        %v1852 = vadd.f32 %v1740, %v1836
        %1853 = vst.msk [vmem:[#allocation5] sm:$0xff] %vm1692, %v1837
        %1854 = vst.msk [vmem:[#allocation5 + $0x8] sm:$0xff] %vm1692, %v1838
        %1855 = vst.msk [vmem:[#allocation5 + $0x10] sm:$0xff] %vm1692, %v1839
        %1856 = vst.msk [vmem:[#allocation5 + $0x18] sm:$0xff] %vm1692, %v1840
        %1857 = vst.msk [vmem:[#allocation5 + $0x20] sm:$0xff] %vm1692, %v1841
        %1858 = vst.msk [vmem:[#allocation5 + $0x28] sm:$0xff] %vm1692, %v1842
        %1859 = vst.msk [vmem:[#allocation5 + $0x30] sm:$0xff] %vm1692, %v1843
        %1860 = vst.msk [vmem:[#allocation5 + $0x38] sm:$0xff] %vm1692, %v1844
        %1861 = vst.msk [vmem:[#allocation5 + $0x40] sm:$0xff] %vm1692, %v1845
        %1862 = vst.msk [vmem:[#allocation5 + $0x48] sm:$0xff] %vm1692, %v1846
        %1863 = vst.msk [vmem:[#allocation5 + $0x50] sm:$0xff] %vm1692, %v1847
        %1864 = vst.msk [vmem:[#allocation5 + $0x58] sm:$0xff] %vm1692, %v1848
        %1865 = vst.msk [vmem:[#allocation5 + $0x60] sm:$0xff] %vm1692, %v1849
        %1866 = vst.msk [vmem:[#allocation5 + $0x68] sm:$0xff] %vm1692, %v1850
        %1867 = vst.msk [vmem:[#allocation5 + $0x70] sm:$0xff] %vm1692, %v1851
        %1868 = vst.msk [vmem:[#allocation5 + $0x78] sm:$0xff] %vm1692, %v1852
        %v1869 = vld [vmem:[#allocation6] sm:$0xff]
        %v1870 = vld [vmem:[#allocation6 + $0x8] sm:$0xff]
        %v1871 = vld [vmem:[#allocation6 + $0x10] sm:$0xff]
        %v1872 = vld [vmem:[#allocation6 + $0x18] sm:$0xff]
        %v1873 = vld [vmem:[#allocation6 + $0x20] sm:$0xff]
        %v1874 = vld [vmem:[#allocation6 + $0x28] sm:$0xff]
        %v1875 = vld [vmem:[#allocation6 + $0x30] sm:$0xff]
        %v1876 = vld [vmem:[#allocation6 + $0x38] sm:$0xff]
        %v1877 = vld [vmem:[#allocation6 + $0x40] sm:$0xff]
        %v1878 = vld [vmem:[#allocation6 + $0x48] sm:$0xff]
        %v1879 = vld [vmem:[#allocation6 + $0x50] sm:$0xff]
        %v1880 = vld [vmem:[#allocation6 + $0x58] sm:$0xff]
        %v1881 = vld [vmem:[#allocation6 + $0x60] sm:$0xff]
        %v1882 = vld [vmem:[#allocation6 + $0x68] sm:$0xff]
        %v1883 = vld [vmem:[#allocation6 + $0x70] sm:$0xff]
        %v1884 = vld [vmem:[#allocation6 + $0x78] sm:$0xff]
        %v1885 = vmul.f32 %v877, %v1869
        %v1886 = vmul.f32 %v879, %v1870
        %v1887 = vmul.f32 %v881, %v1871
        %v1888 = vmul.f32 %v883, %v1872
        %v1889 = vmul.f32 %v885, %v1873
        %v1890 = vmul.f32 %v887, %v1874
        %v1891 = vmul.f32 %v889, %v1875
        %v1892 = vmul.f32 %v891, %v1876
        %v1893 = vmul.f32 %v893, %v1877
        %v1894 = vmul.f32 %v895, %v1878
        %v1895 = vmul.f32 %v897, %v1879
        %v1896 = vmul.f32 %v899, %v1880
        %v1897 = vmul.f32 %v901, %v1881
        %v1898 = vmul.f32 %v903, %v1882
        %v1899 = vmul.f32 %v905, %v1883
        %v1900 = vmul.f32 %v907, %v1884
        %v1901 = vmul.f32 %v1389, %v476
        %v1902 = vmul.f32 %v1391, %v477
        %v1903 = vmul.f32 %v1393, %v478
        %v1904 = vmul.f32 %v1395, %v479
        %v1905 = vmul.f32 %v1397, %v480
        %v1906 = vmul.f32 %v1399, %v481
        %v1907 = vmul.f32 %v1401, %v482
        %v1908 = vmul.f32 %v1403, %v483
        %v1909 = vmul.f32 %v1405, %v484
        %v1910 = vmul.f32 %v1407, %v485
        %v1911 = vmul.f32 %v1409, %v486
        %v1912 = vmul.f32 %v1411, %v487
        %v1913 = vmul.f32 %v1413, %v488
        %v1914 = vmul.f32 %v1415, %v489
        %v1915 = vmul.f32 %v1417, %v490
        %v1916 = vmul.f32 %v1419, %v491
        %v1917 = vmul.f32 %v1421, %v492
        %v1918 = vmul.f32 %v1423, %v493
        %v1919 = vmul.f32 %v1425, %v494
        %v1920 = vmul.f32 %v1427, %v495
        %v1921 = vmul.f32 %v1429, %v496
        %v1922 = vmul.f32 %v1431, %v497
        %v1923 = vmul.f32 %v1433, %v498
        %v1924 = vmul.f32 %v1435, %v499
        %v1925 = vmul.f32 %v1437, %v500
        %v1926 = vmul.f32 %v1439, %v501
        %v1927 = vmul.f32 %v1441, %v502
        %v1928 = vmul.f32 %v1443, %v503
        %v1929 = vmul.f32 %v1445, %v504
        %v1930 = vmul.f32 %v1447, %v505
        %v1931 = vmul.f32 %v1449, %v506
        %v1932 = vmul.f32 %v1451, %v507
        %v1933 = vmul.f32 %v1453, %v508
        %v1934 = vmul.f32 %v1455, %v509
        %v1935 = vmul.f32 %v1457, %v510
        %v1936 = vmul.f32 %v1459, %v511
        %v1937 = vmul.f32 %v1461, %v512
        %v1938 = vmul.f32 %v1463, %v513
        %v1939 = vmul.f32 %v1465, %v514
        %v1940 = vmul.f32 %v1467, %v515
        %v1941 = vmul.f32 %v1469, %v516
        %v1942 = vmul.f32 %v1471, %v517
        %v1943 = vmul.f32 %v1473, %v518
        %v1944 = vmul.f32 %v1475, %v519
        %v1945 = vmul.f32 %v1477, %v520
        %v1946 = vmul.f32 %v1479, %v521
        %v1947 = vmul.f32 %v1481, %v522
        %v1948 = vmul.f32 %v1483, %v523
        %v1949 = vmul.f32 %v1485, %v524
        %v1950 = vmul.f32 %v1487, %v525
        %v1951 = vmul.f32 %v1489, %v526
        %v1952 = vmul.f32 %v1491, %v527
        %v1953 = vmul.f32 %v1493, %v528
        %v1954 = vmul.f32 %v1495, %v529
        %v1955 = vmul.f32 %v1497, %v530
        %v1956 = vmul.f32 %v1499, %v531
        %v1957 = vmul.f32 %v1501, %v532
        %v1958 = vmul.f32 %v1503, %v533
        %v1959 = vmul.f32 %v1505, %v534
        %v1960 = vmul.f32 %v1507, %v535
        %v1961 = vmul.f32 %v1509, %v536
        %v1962 = vmul.f32 %v1511, %v537
        %v1963 = vmul.f32 %v1513, %v538
        %v1964 = vmul.f32 %v1515, %v539
        %v1965 = vmul.f32 %v1517, %v540
        %v1966 = vmul.f32 %v1519, %v541
        %v1967 = vmul.f32 %v1521, %v542
        %v1968 = vmul.f32 %v1523, %v543
        %v1969 = vmul.f32 %v1525, %v544
        %v1970 = vmul.f32 %v1527, %v545
        %v1971 = vmul.f32 %v1529, %v546
        %v1972 = vmul.f32 %v1531, %v547
        %v1973 = vmul.f32 %v1533, %v548
        %v1974 = vmul.f32 %v1535, %v549
        %v1975 = vmul.f32 %v1537, %v550
        %v1976 = vmul.f32 %v1539, %v551
        %v1977 = vmul.f32 %v1541, %v552
        %v1978 = vmul.f32 %v1543, %v553
        %v1979 = vmul.f32 %v1545, %v554
        %v1980 = vmul.f32 %v1547, %v555
        %v1981 = vadd.f32 %v1901, %v1902
        %v1982 = vadd.f32 %v1981, %v1903
        %v1983 = vadd.f32 %v1982, %v1904
        %v1984 = vadd.f32 %v1983, %v1905
        %1985 = vadd.xlane.f32.xlu0 %v1984
        %v1986 = vpop.xlane.xlu0 %1985
        %v1987 = vadd.f32 %v1906, %v1907
        %v1988 = vadd.f32 %v1987, %v1908
        %v1989 = vadd.f32 %v1988, %v1909
        %v1990 = vadd.f32 %v1989, %v1910
        %1991 = vadd.xlane.f32.xlu0 %v1990
        %v1992 = vpop.xlane.xlu0 %1991
        %v1993 = vadd.f32 %v1911, %v1912
        %v1994 = vadd.f32 %v1993, %v1913
        %v1995 = vadd.f32 %v1994, %v1914
        %v1996 = vadd.f32 %v1995, %v1915
        %1997 = vadd.xlane.f32.xlu0 %v1996
        %v1998 = vpop.xlane.xlu0 %1997
        %v1999 = vadd.f32 %v1916, %v1917
        %v2000 = vadd.f32 %v1999, %v1918
        %v2001 = vadd.f32 %v2000, %v1919
        %v2002 = vadd.f32 %v2001, %v1920
        %2003 = vadd.xlane.f32.xlu0 %v2002
        %v2004 = vpop.xlane.xlu0 %2003
        %v2005 = vadd.f32 %v1921, %v1922
        %v2006 = vadd.f32 %v2005, %v1923
        %v2007 = vadd.f32 %v2006, %v1924
        %v2008 = vadd.f32 %v2007, %v1925
        %2009 = vadd.xlane.f32.xlu0 %v2008
        %v2010 = vpop.xlane.xlu0 %2009
        %v2011 = vadd.f32 %v1926, %v1927
        %v2012 = vadd.f32 %v2011, %v1928
        %v2013 = vadd.f32 %v2012, %v1929
        %v2014 = vadd.f32 %v2013, %v1930
        %2015 = vadd.xlane.f32.xlu0 %v2014
        %v2016 = vpop.xlane.xlu0 %2015
        %v2017 = vadd.f32 %v1931, %v1932
        %v2018 = vadd.f32 %v2017, %v1933
        %v2019 = vadd.f32 %v2018, %v1934
        %v2020 = vadd.f32 %v2019, %v1935
        %2021 = vadd.xlane.f32.xlu0 %v2020
        %v2022 = vpop.xlane.xlu0 %2021
        %v2023 = vadd.f32 %v1936, %v1937
        %v2024 = vadd.f32 %v2023, %v1938
        %v2025 = vadd.f32 %v2024, %v1939
        %v2026 = vadd.f32 %v2025, %v1940
        %2027 = vadd.xlane.f32.xlu0 %v2026
        %v2028 = vpop.xlane.xlu0 %2027
        %v2029 = vadd.f32 %v1941, %v1942
        %v2030 = vadd.f32 %v2029, %v1943
        %v2031 = vadd.f32 %v2030, %v1944
        %v2032 = vadd.f32 %v2031, %v1945
        %2033 = vadd.xlane.f32.xlu0 %v2032
        %v2034 = vpop.xlane.xlu0 %2033
        %v2035 = vadd.f32 %v1946, %v1947
        %v2036 = vadd.f32 %v2035, %v1948
        %v2037 = vadd.f32 %v2036, %v1949
        %v2038 = vadd.f32 %v2037, %v1950
        %2039 = vadd.xlane.f32.xlu0 %v2038
        %v2040 = vpop.xlane.xlu0 %2039
        %v2041 = vadd.f32 %v1951, %v1952
        %v2042 = vadd.f32 %v2041, %v1953
        %v2043 = vadd.f32 %v2042, %v1954
        %v2044 = vadd.f32 %v2043, %v1955
        %2045 = vadd.xlane.f32.xlu0 %v2044
        %v2046 = vpop.xlane.xlu0 %2045
        %v2047 = vadd.f32 %v1956, %v1957
        %v2048 = vadd.f32 %v2047, %v1958
        %v2049 = vadd.f32 %v2048, %v1959
        %v2050 = vadd.f32 %v2049, %v1960
        %2051 = vadd.xlane.f32.xlu0 %v2050
        %v2052 = vpop.xlane.xlu0 %2051
        %v2053 = vadd.f32 %v1961, %v1962
        %v2054 = vadd.f32 %v2053, %v1963
        %v2055 = vadd.f32 %v2054, %v1964
        %v2056 = vadd.f32 %v2055, %v1965
        %2057 = vadd.xlane.f32.xlu0 %v2056
        %v2058 = vpop.xlane.xlu0 %2057
        %v2059 = vadd.f32 %v1966, %v1967
        %v2060 = vadd.f32 %v2059, %v1968
        %v2061 = vadd.f32 %v2060, %v1969
        %v2062 = vadd.f32 %v2061, %v1970
        %2063 = vadd.xlane.f32.xlu0 %v2062
        %v2064 = vpop.xlane.xlu0 %2063
        %v2065 = vadd.f32 %v1971, %v1972
        %v2066 = vadd.f32 %v2065, %v1973
        %v2067 = vadd.f32 %v2066, %v1974
        %v2068 = vadd.f32 %v2067, %v1975
        %2069 = vadd.xlane.f32.xlu0 %v2068
        %v2070 = vpop.xlane.xlu0 %2069
        %v2071 = vadd.f32 %v1976, %v1977
        %v2072 = vadd.f32 %v2071, %v1978
        %v2073 = vadd.f32 %v2072, %v1979
        %v2074 = vadd.f32 %v2073, %v1980
        %2075 = vadd.xlane.f32.xlu0 %v2074
        %v2076 = vpop.xlane.xlu0 %2075
        %v2077 = vadd.f32 %v1885, %v1986
        %v2078 = vadd.f32 %v1886, %v1992
        %v2079 = vadd.f32 %v1887, %v1998
        %v2080 = vadd.f32 %v1888, %v2004
        %v2081 = vadd.f32 %v1889, %v2010
        %v2082 = vadd.f32 %v1890, %v2016
        %v2083 = vadd.f32 %v1891, %v2022
        %v2084 = vadd.f32 %v1892, %v2028
        %v2085 = vadd.f32 %v1893, %v2034
        %v2086 = vadd.f32 %v1894, %v2040
        %v2087 = vadd.f32 %v1895, %v2046
        %v2088 = vadd.f32 %v1896, %v2052
        %v2089 = vadd.f32 %v1897, %v2058
        %v2090 = vadd.f32 %v1898, %v2064
        %v2091 = vadd.f32 %v1899, %v2070
        %v2092 = vadd.f32 %v1900, %v2076
        %2093 = vst.msk [vmem:[#allocation6] sm:$0xff] %vm1692, %v2077
        %2094 = vst.msk [vmem:[#allocation6 + $0x8] sm:$0xff] %vm1692, %v2078
        %2095 = vst.msk [vmem:[#allocation6 + $0x10] sm:$0xff] %vm1692, %v2079
        %2096 = vst.msk [vmem:[#allocation6 + $0x18] sm:$0xff] %vm1692, %v2080
        %2097 = vst.msk [vmem:[#allocation6 + $0x20] sm:$0xff] %vm1692, %v2081
        %2098 = vst.msk [vmem:[#allocation6 + $0x28] sm:$0xff] %vm1692, %v2082
        %2099 = vst.msk [vmem:[#allocation6 + $0x30] sm:$0xff] %vm1692, %v2083
        %2100 = vst.msk [vmem:[#allocation6 + $0x38] sm:$0xff] %vm1692, %v2084
        %2101 = vst.msk [vmem:[#allocation6 + $0x40] sm:$0xff] %vm1692, %v2085
        %2102 = vst.msk [vmem:[#allocation6 + $0x48] sm:$0xff] %vm1692, %v2086
        %2103 = vst.msk [vmem:[#allocation6 + $0x50] sm:$0xff] %vm1692, %v2087
        %2104 = vst.msk [vmem:[#allocation6 + $0x58] sm:$0xff] %vm1692, %v2088
        %2105 = vst.msk [vmem:[#allocation6 + $0x60] sm:$0xff] %vm1692, %v2089
        %2106 = vst.msk [vmem:[#allocation6 + $0x68] sm:$0xff] %vm1692, %v2090
        %2107 = vst.msk [vmem:[#allocation6 + $0x70] sm:$0xff] %vm1692, %v2091
        %2108 = vst.msk [vmem:[#allocation6 + $0x78] sm:$0xff] %vm1692, %v2092
        %2109 = vst.msk [vmem:[#allocation2] sm:$0xff] %vm1692, %v668
        %2110 = vst.msk [vmem:[#allocation2 + $0x8] sm:$0xff] %vm1692, %v669
        %2111 = vst.msk [vmem:[#allocation2 + $0x10] sm:$0xff] %vm1692, %v670
        %2112 = vst.msk [vmem:[#allocation2 + $0x18] sm:$0xff] %vm1692, %v671
        %2113 = vst.msk [vmem:[#allocation2 + $0x20] sm:$0xff] %vm1692, %v672
        %2114 = vst.msk [vmem:[#allocation2 + $0x28] sm:$0xff] %vm1692, %v673
        %2115 = vst.msk [vmem:[#allocation2 + $0x30] sm:$0xff] %vm1692, %v674
        %2116 = vst.msk [vmem:[#allocation2 + $0x38] sm:$0xff] %vm1692, %v675
        %2117 = vst.msk [vmem:[#allocation2 + $0x40] sm:$0xff] %vm1692, %v676
        %2118 = vst.msk [vmem:[#allocation2 + $0x48] sm:$0xff] %vm1692, %v677
        %2119 = vst.msk [vmem:[#allocation2 + $0x50] sm:$0xff] %vm1692, %v678
        %2120 = vst.msk [vmem:[#allocation2 + $0x58] sm:$0xff] %vm1692, %v679
        %2121 = vst.msk [vmem:[#allocation2 + $0x60] sm:$0xff] %vm1692, %v680
        %2122 = vst.msk [vmem:[#allocation2 + $0x68] sm:$0xff] %vm1692, %v681
        %2123 = vst.msk [vmem:[#allocation2 + $0x70] sm:$0xff] %vm1692, %v682
        %2124 = vst.msk [vmem:[#allocation2 + $0x78] sm:$0xff] %vm1692, %v683
        %2125 = vst.msk [vmem:[#allocation3] sm:$0xff] %vm1692, %v796
        %2126 = vst.msk [vmem:[#allocation3 + $0x8] sm:$0xff] %vm1692, %v797
        %2127 = vst.msk [vmem:[#allocation3 + $0x10] sm:$0xff] %vm1692, %v798
        %2128 = vst.msk [vmem:[#allocation3 + $0x18] sm:$0xff] %vm1692, %v799
        %2129 = vst.msk [vmem:[#allocation3 + $0x20] sm:$0xff] %vm1692, %v800
        %2130 = vst.msk [vmem:[#allocation3 + $0x28] sm:$0xff] %vm1692, %v801
        %2131 = vst.msk [vmem:[#allocation3 + $0x30] sm:$0xff] %vm1692, %v802
        %2132 = vst.msk [vmem:[#allocation3 + $0x38] sm:$0xff] %vm1692, %v803
        %2133 = vst.msk [vmem:[#allocation3 + $0x40] sm:$0xff] %vm1692, %v804
        %2134 = vst.msk [vmem:[#allocation3 + $0x48] sm:$0xff] %vm1692, %v805
        %2135 = vst.msk [vmem:[#allocation3 + $0x50] sm:$0xff] %vm1692, %v806
        %2136 = vst.msk [vmem:[#allocation3 + $0x58] sm:$0xff] %vm1692, %v807
        %2137 = vst.msk [vmem:[#allocation3 + $0x60] sm:$0xff] %vm1692, %v808
        %2138 = vst.msk [vmem:[#allocation3 + $0x68] sm:$0xff] %vm1692, %v809
        %2139 = vst.msk [vmem:[#allocation3 + $0x70] sm:$0xff] %vm1692, %v810
        %2140 = vst.msk [vmem:[#allocation3 + $0x78] sm:$0xff] %vm1692, %v811
        // Predicated region
        $region41: #{tpu_custom_call.1} parent=27 // pred_check
          %p2141 = pneg %p231
        $region42: #{tpu_custom_call.1} parent=27 // pred_check_branch
          %2143 = sbr.rel (%p2141) target = $region44
        $region43: #{tpu_custom_call.1} parent=27 // pred_region
          %v2144 = vld [vmem:[#allocation6] sm:$0xff]
          %v2145 = vld [vmem:[#allocation6 + $0x8] sm:$0xff]
          %v2146 = vld [vmem:[#allocation6 + $0x10] sm:$0xff]
          %v2147 = vld [vmem:[#allocation6 + $0x18] sm:$0xff]
          %v2148 = vld [vmem:[#allocation6 + $0x20] sm:$0xff]
          %v2149 = vld [vmem:[#allocation6 + $0x28] sm:$0xff]
          %v2150 = vld [vmem:[#allocation6 + $0x30] sm:$0xff]
          %v2151 = vld [vmem:[#allocation6 + $0x38] sm:$0xff]
          %v2152 = vld [vmem:[#allocation6 + $0x40] sm:$0xff]
          %v2153 = vld [vmem:[#allocation6 + $0x48] sm:$0xff]
          %v2154 = vld [vmem:[#allocation6 + $0x50] sm:$0xff]
          %v2155 = vld [vmem:[#allocation6 + $0x58] sm:$0xff]
          %v2156 = vld [vmem:[#allocation6 + $0x60] sm:$0xff]
          %v2157 = vld [vmem:[#allocation6 + $0x68] sm:$0xff]
          %v2158 = vld [vmem:[#allocation6 + $0x70] sm:$0xff]
          %v2159 = vld [vmem:[#allocation6 + $0x78] sm:$0xff]
          %v2160 = vld [vmem:[#allocation5] sm:$0xff]
          %v2161 = vld [vmem:[#allocation5 + $0x8] sm:$0xff]
          %v2162 = vld [vmem:[#allocation5 + $0x10] sm:$0xff]
          %v2163 = vld [vmem:[#allocation5 + $0x18] sm:$0xff]
          %v2164 = vld [vmem:[#allocation5 + $0x20] sm:$0xff]
          %v2165 = vld [vmem:[#allocation5 + $0x28] sm:$0xff]
          %v2166 = vld [vmem:[#allocation5 + $0x30] sm:$0xff]
          %v2167 = vld [vmem:[#allocation5 + $0x38] sm:$0xff]
          %v2168 = vld [vmem:[#allocation5 + $0x40] sm:$0xff]
          %v2169 = vld [vmem:[#allocation5 + $0x48] sm:$0xff]
          %v2170 = vld [vmem:[#allocation5 + $0x50] sm:$0xff]
          %v2171 = vld [vmem:[#allocation5 + $0x58] sm:$0xff]
          %v2172 = vld [vmem:[#allocation5 + $0x60] sm:$0xff]
          %v2173 = vld [vmem:[#allocation5 + $0x68] sm:$0xff]
          %v2174 = vld [vmem:[#allocation5 + $0x70] sm:$0xff]
          %v2175 = vld [vmem:[#allocation5 + $0x78] sm:$0xff]
          %v2176 = vrcp.pop %v2160
          %v2177 = vmul.f32 %v2144, %v2176
          %v2178 = vrcp.pop %v2161
          %v2179 = vmul.f32 %v2145, %v2178
          %v2180 = vrcp.pop %v2162
          %v2181 = vmul.f32 %v2146, %v2180
          %v2182 = vrcp.pop %v2163
          %v2183 = vmul.f32 %v2147, %v2182
          %v2184 = vrcp.pop %v2164
          %v2185 = vmul.f32 %v2148, %v2184
          %v2186 = vrcp.pop %v2165
          %v2187 = vmul.f32 %v2149, %v2186
          %v2188 = vrcp.pop %v2166
          %v2189 = vmul.f32 %v2150, %v2188
          %v2190 = vrcp.pop %v2167
          %v2191 = vmul.f32 %v2151, %v2190
          %v2192 = vrcp.pop %v2168
          %v2193 = vmul.f32 %v2152, %v2192
          %v2194 = vrcp.pop %v2169
          %v2195 = vmul.f32 %v2153, %v2194
          %v2196 = vrcp.pop %v2170
          %v2197 = vmul.f32 %v2154, %v2196
          %v2198 = vrcp.pop %v2171
          %v2199 = vmul.f32 %v2155, %v2198
          %v2200 = vrcp.pop %v2172
          %v2201 = vmul.f32 %v2156, %v2200
          %v2202 = vrcp.pop %v2173
          %v2203 = vmul.f32 %v2157, %v2202
          %v2204 = vrcp.pop %v2174
          %v2205 = vmul.f32 %v2158, %v2204
          %v2206 = vrcp.pop %v2175
          %v2207 = vmul.f32 %v2159, %v2206
          %v2208 = vld [vmem:[#allocation2] sm:$0xff]
          %v2209 = vld [vmem:[#allocation2 + $0x8] sm:$0xff]
          %v2210 = vld [vmem:[#allocation2 + $0x10] sm:$0xff]
          %v2211 = vld [vmem:[#allocation2 + $0x18] sm:$0xff]
          %v2212 = vld [vmem:[#allocation2 + $0x20] sm:$0xff]
          %v2213 = vld [vmem:[#allocation2 + $0x28] sm:$0xff]
          %v2214 = vld [vmem:[#allocation2 + $0x30] sm:$0xff]
          %v2215 = vld [vmem:[#allocation2 + $0x38] sm:$0xff]
          %v2216 = vld [vmem:[#allocation2 + $0x40] sm:$0xff]
          %v2217 = vld [vmem:[#allocation2 + $0x48] sm:$0xff]
          %v2218 = vld [vmem:[#allocation2 + $0x50] sm:$0xff]
          %v2219 = vld [vmem:[#allocation2 + $0x58] sm:$0xff]
          %v2220 = vld [vmem:[#allocation2 + $0x60] sm:$0xff]
          %v2221 = vld [vmem:[#allocation2 + $0x68] sm:$0xff]
          %v2222 = vld [vmem:[#allocation2 + $0x70] sm:$0xff]
          %v2223 = vld [vmem:[#allocation2 + $0x78] sm:$0xff]
          %v2224 = vld [vmem:[#allocation3] sm:$0xff]
          %v2225 = vld [vmem:[#allocation3 + $0x8] sm:$0xff]
          %v2226 = vld [vmem:[#allocation3 + $0x10] sm:$0xff]
          %v2227 = vld [vmem:[#allocation3 + $0x18] sm:$0xff]
          %v2228 = vld [vmem:[#allocation3 + $0x20] sm:$0xff]
          %v2229 = vld [vmem:[#allocation3 + $0x28] sm:$0xff]
          %v2230 = vld [vmem:[#allocation3 + $0x30] sm:$0xff]
          %v2231 = vld [vmem:[#allocation3 + $0x38] sm:$0xff]
          %v2232 = vld [vmem:[#allocation3 + $0x40] sm:$0xff]
          %v2233 = vld [vmem:[#allocation3 + $0x48] sm:$0xff]
          %v2234 = vld [vmem:[#allocation3 + $0x50] sm:$0xff]
          %v2235 = vld [vmem:[#allocation3 + $0x58] sm:$0xff]
          %v2236 = vld [vmem:[#allocation3 + $0x60] sm:$0xff]
          %v2237 = vld [vmem:[#allocation3 + $0x68] sm:$0xff]
          %v2238 = vld [vmem:[#allocation3 + $0x70] sm:$0xff]
          %v2239 = vld [vmem:[#allocation3 + $0x78] sm:$0xff]
          %v2240 = vsub.f32 %v2208, %v2224
          %v2241 = vsub.f32 %v2209, %v2225
          %v2242 = vsub.f32 %v2210, %v2226
          %v2243 = vsub.f32 %v2211, %v2227
          %v2244 = vsub.f32 %v2212, %v2228
          %v2245 = vsub.f32 %v2213, %v2229
          %v2246 = vsub.f32 %v2214, %v2230
          %v2247 = vsub.f32 %v2215, %v2231
          %v2248 = vsub.f32 %v2216, %v2232
          %v2249 = vsub.f32 %v2217, %v2233
          %v2250 = vsub.f32 %v2218, %v2234
          %v2251 = vsub.f32 %v2219, %v2235
          %v2252 = vsub.f32 %v2220, %v2236
          %v2253 = vsub.f32 %v2221, %v2237
          %v2254 = vsub.f32 %v2222, %v2238
          %v2255 = vsub.f32 %v2223, %v2239
          %v2256 = vadd.f32 %v2177, %v2240
          %v2257 = vadd.f32 %v2179, %v2241
          %v2258 = vadd.f32 %v2181, %v2242
          %v2259 = vadd.f32 %v2183, %v2243
          %v2260 = vadd.f32 %v2185, %v2244
          %v2261 = vadd.f32 %v2187, %v2245
          %v2262 = vadd.f32 %v2189, %v2246
          %v2263 = vadd.f32 %v2191, %v2247
          %v2264 = vadd.f32 %v2193, %v2248
          %v2265 = vadd.f32 %v2195, %v2249
          %v2266 = vadd.f32 %v2197, %v2250
          %v2267 = vadd.f32 %v2199, %v2251
          %v2268 = vadd.f32 %v2201, %v2252
          %v2269 = vadd.f32 %v2203, %v2253
          %v2270 = vadd.f32 %v2205, %v2254
          %v2271 = vadd.f32 %v2207, %v2255
          %v2272 = vld [vmem:[#allocation4] sm:$0xff]
          %v2273 = vld [vmem:[#allocation4 + $0x8] sm:$0xff]
          %v2274 = vld [vmem:[#allocation4 + $0x10] sm:$0xff]
          %v2275 = vld [vmem:[#allocation4 + $0x18] sm:$0xff]
          %v2276 = vld [vmem:[#allocation4 + $0x20] sm:$0xff]
          %v2277 = vld [vmem:[#allocation4 + $0x28] sm:$0xff]
          %v2278 = vld [vmem:[#allocation4 + $0x30] sm:$0xff]
          %v2279 = vld [vmem:[#allocation4 + $0x38] sm:$0xff]
          %v2280 = vld [vmem:[#allocation4 + $0x40] sm:$0xff]
          %v2281 = vld [vmem:[#allocation4 + $0x48] sm:$0xff]
          %v2282 = vld [vmem:[#allocation4 + $0x50] sm:$0xff]
          %v2283 = vld [vmem:[#allocation4 + $0x58] sm:$0xff]
          %v2284 = vld [vmem:[#allocation4 + $0x60] sm:$0xff]
          %v2285 = vld [vmem:[#allocation4 + $0x68] sm:$0xff]
          %v2286 = vld [vmem:[#allocation4 + $0x70] sm:$0xff]
          %v2287 = vld [vmem:[#allocation4 + $0x78] sm:$0xff]
          %v2288 = vlog2.pop %v2272
          %v2289 = vmul.f32 %v2288, 0.6931472
          %v2290 = vlog2.pop %v2273
          %v2291 = vmul.f32 %v2290, 0.6931472
          %v2292 = vlog2.pop %v2274
          %v2293 = vmul.f32 %v2292, 0.6931472
          %v2294 = vlog2.pop %v2275
          %v2295 = vmul.f32 %v2294, 0.6931472
          %v2296 = vlog2.pop %v2276
          %v2297 = vmul.f32 %v2296, 0.6931472
          %v2298 = vlog2.pop %v2277
          %v2299 = vmul.f32 %v2298, 0.6931472
          %v2300 = vlog2.pop %v2278
          %v2301 = vmul.f32 %v2300, 0.6931472
          %v2302 = vlog2.pop %v2279
          %v2303 = vmul.f32 %v2302, 0.6931472
          %v2304 = vlog2.pop %v2280
          %v2305 = vmul.f32 %v2304, 0.6931472
          %v2306 = vlog2.pop %v2281
          %v2307 = vmul.f32 %v2306, 0.6931472
          %v2308 = vlog2.pop %v2282
          %v2309 = vmul.f32 %v2308, 0.6931472
          %v2310 = vlog2.pop %v2283
          %v2311 = vmul.f32 %v2310, 0.6931472
          %v2312 = vlog2.pop %v2284
          %v2313 = vmul.f32 %v2312, 0.6931472
          %v2314 = vlog2.pop %v2285
          %v2315 = vmul.f32 %v2314, 0.6931472
          %v2316 = vlog2.pop %v2286
          %v2317 = vmul.f32 %v2316, 0.6931472
          %v2318 = vlog2.pop %v2287
          %v2319 = vmul.f32 %v2318, 0.6931472
          %v2320 = vadd.f32 %v2256, %v2289
          %v2321 = vadd.f32 %v2257, %v2291
          %v2322 = vadd.f32 %v2258, %v2293
          %v2323 = vadd.f32 %v2259, %v2295
          %v2324 = vadd.f32 %v2260, %v2297
          %v2325 = vadd.f32 %v2261, %v2299
          %v2326 = vadd.f32 %v2262, %v2301
          %v2327 = vadd.f32 %v2263, %v2303
          %v2328 = vadd.f32 %v2264, %v2305
          %v2329 = vadd.f32 %v2265, %v2307
          %v2330 = vadd.f32 %v2266, %v2309
          %v2331 = vadd.f32 %v2267, %v2311
          %v2332 = vadd.f32 %v2268, %v2313
          %v2333 = vadd.f32 %v2269, %v2315
          %v2334 = vadd.f32 %v2270, %v2317
          %v2335 = vadd.f32 %v2271, %v2319
          %v2336 = vlog2.pop %v2160
          %v2337 = vmul.f32 %v2336, 0.6931472
          %v2338 = vlog2.pop %v2161
          %v2339 = vmul.f32 %v2338, 0.6931472
          %v2340 = vlog2.pop %v2162
          %v2341 = vmul.f32 %v2340, 0.6931472
          %v2342 = vlog2.pop %v2163
          %v2343 = vmul.f32 %v2342, 0.6931472
          %v2344 = vlog2.pop %v2164
          %v2345 = vmul.f32 %v2344, 0.6931472
          %v2346 = vlog2.pop %v2165
          %v2347 = vmul.f32 %v2346, 0.6931472
          %v2348 = vlog2.pop %v2166
          %v2349 = vmul.f32 %v2348, 0.6931472
          %v2350 = vlog2.pop %v2167
          %v2351 = vmul.f32 %v2350, 0.6931472
          %v2352 = vlog2.pop %v2168
          %v2353 = vmul.f32 %v2352, 0.6931472
          %v2354 = vlog2.pop %v2169
          %v2355 = vmul.f32 %v2354, 0.6931472
          %v2356 = vlog2.pop %v2170
          %v2357 = vmul.f32 %v2356, 0.6931472
          %v2358 = vlog2.pop %v2171
          %v2359 = vmul.f32 %v2358, 0.6931472
          %v2360 = vlog2.pop %v2172
          %v2361 = vmul.f32 %v2360, 0.6931472
          %v2362 = vlog2.pop %v2173
          %v2363 = vmul.f32 %v2362, 0.6931472
          %v2364 = vlog2.pop %v2174
          %v2365 = vmul.f32 %v2364, 0.6931472
          %v2366 = vlog2.pop %v2175
          %v2367 = vmul.f32 %v2366, 0.6931472
          %v2368 = vsub.f32 %v2320, %v2337
          %v2369 = vsub.f32 %v2321, %v2339
          %v2370 = vsub.f32 %v2322, %v2341
          %v2371 = vsub.f32 %v2323, %v2343
          %v2372 = vsub.f32 %v2324, %v2345
          %v2373 = vsub.f32 %v2325, %v2347
          %v2374 = vsub.f32 %v2326, %v2349
          %v2375 = vsub.f32 %v2327, %v2351
          %v2376 = vsub.f32 %v2328, %v2353
          %v2377 = vsub.f32 %v2329, %v2355
          %v2378 = vsub.f32 %v2330, %v2357
          %v2379 = vsub.f32 %v2331, %v2359
          %v2380 = vsub.f32 %v2332, %v2361
          %v2381 = vsub.f32 %v2333, %v2363
          %v2382 = vsub.f32 %v2334, %v2365
          %v2383 = vsub.f32 %v2335, %v2367
          %2384 = vst.msk [vmem:[%s229] sm:$0xff] %vm1692, %v2368
          %2385 = vst.msk [vmem:[%s229 + $0x8] sm:$0xff] %vm1692, %v2369
          %2386 = vst.msk [vmem:[%s229 + $0x10] sm:$0xff] %vm1692, %v2370
          %2387 = vst.msk [vmem:[%s229 + $0x18] sm:$0xff] %vm1692, %v2371
          %2388 = vst.msk [vmem:[%s229 + $0x20] sm:$0xff] %vm1692, %v2372
          %2389 = vst.msk [vmem:[%s229 + $0x28] sm:$0xff] %vm1692, %v2373
          %2390 = vst.msk [vmem:[%s229 + $0x30] sm:$0xff] %vm1692, %v2374
          %2391 = vst.msk [vmem:[%s229 + $0x38] sm:$0xff] %vm1692, %v2375
          %2392 = vst.msk [vmem:[%s229 + $0x40] sm:$0xff] %vm1692, %v2376
          %2393 = vst.msk [vmem:[%s229 + $0x48] sm:$0xff] %vm1692, %v2377
          %2394 = vst.msk [vmem:[%s229 + $0x50] sm:$0xff] %vm1692, %v2378
          %2395 = vst.msk [vmem:[%s229 + $0x58] sm:$0xff] %vm1692, %v2379
          %2396 = vst.msk [vmem:[%s229 + $0x60] sm:$0xff] %vm1692, %v2380
          %2397 = vst.msk [vmem:[%s229 + $0x68] sm:$0xff] %vm1692, %v2381
          %2398 = vst.msk [vmem:[%s229 + $0x70] sm:$0xff] %vm1692, %v2382
          %2399 = vst.msk [vmem:[%s229 + $0x78] sm:$0xff] %vm1692, %v2383
        $region44: #{tpu_custom_call.1} parent=27 // pred_fallthru
          _
        %s2400 = smul.u32 16, %s23
        %p2401 = scmp.lt.s32.totalorder %s2400, 31
        %s2402 = scalar_select %p2401, %s2400, 31
        %s2403 = smul.addr %s2402, 8
        %s2404 = scalar_lea.vmem %s2, %s2403
        // Predicated region
        $region45: #{tpu_custom_call.1} parent=27 // pred_check
          %p2405 = pneg %p105
        $region46: #{tpu_custom_call.1} parent=27 // pred_check_branch
          %2407 = sbr.rel (%p2405) target = $region48
        $region47: #{tpu_custom_call.1} parent=27 // pred_region
          %s2408 = smul.u32 16, %s23
        $region48: #{tpu_custom_call.1} parent=27 // pred_fallthru
          _
      $region28: #{tpu_custom_call.1} parent=5 // pred_fallthru
        _
      %p2409 = scmp.le.s32.totalorder 2, %s14
      // Predicated region
      $region49: #{tpu_custom_call.1} parent=5 // pred_check
        %p2410 = pneg %p2409
      $region50: #{tpu_custom_call.1} parent=5 // pred_check_branch
        %2412 = sbr.rel (%p2410) target = $region52
      $region51: #{tpu_custom_call.1} parent=5 // pred_region
        %s2413 = ssub.s32 %s14, 2
        // Predicated region
        $region53: #{tpu_custom_call.1} parent=51 // pred_check
          %p2414 = pneg %p111
        $region54: #{tpu_custom_call.1} parent=51 // pred_check_branch
          %2416 = sbr.rel (%p2414) target = $region56
        $region55: #{tpu_custom_call.1} parent=51 // pred_region
          %s2417 = smul.u32 16, %s25
          %p2418 = scmp.lt.s32.totalorder %s2417, 31
          %s2419 = scalar_select %p2418, %s2417, 31
          %s2420 = smul.addr %s2419, 8
          %s2421 = scalar_lea.vmem %s2, %s2420
        $region56: #{tpu_custom_call.1} parent=51 // pred_fallthru
          _
      $region52: #{tpu_custom_call.1} parent=5 // pred_fallthru
        _
    $region6: #{tpu_custom_call.1} parent=1 // loop_footer
      %s18 = sadd.s32 1, %s14
    $region7: #{tpu_custom_call.1} parent=1 // loop_footer_branch
      %13 = sbr.rel target = $region3
    $region8: #{tpu_custom_call.1} parent=1 // loop_exit
      _
    %2422 = vsyncpa [#allocation8], 1
    %s2423 = scalar_lea.sflag [#allocation8], 1
    %2424 = vsyncpa %s2423, 1
    %2425 = vsyncpa [#allocation10], 1
    %s2426 = scalar_lea.sflag [#allocation10], 1
    %2427 = vsyncpa %s2426, 1

</llo_original>
